<compile_context>
chip_gen: v5e
topology: v5e:2x2
jax: 0.10.0
libtpu: 0.0.40
codegen_flags: <defaults>
</compile_context>

<pallas_src>
import functools

import jax
import jax.numpy as jnp
from jax.experimental import pallas as pl
from jax.experimental.pallas import tpu as pltpu


# ----------------------------- Pallas kernel ------------------------------- #

def _upsample_kernel(x_ref, w_ref, b_ref, o_ref):
    # x_ref: (Cin, tile_s)      native-layout activations, voxels on lanes
    # w_ref: (8*Cout, Cin)      rows ordered (kd, kh, kw, cout)
    # b_ref: (8*Cout, 1)        bias replicated per tap
    # o_ref: (8*Cout, tile_s)   lane-dense output block (full-width stores)
    acc = jnp.dot(w_ref[...], x_ref[...], preferred_element_type=jnp.float32)
    o_ref[...] = (acc + b_ref[...]).astype(o_ref.dtype)


# ------------------------------ Tile selection ------------------------------ #

def _pick_tile_s(S, n_batch, rows, *, target_steps=8, max_block_bytes=4 << 20):
    """Lane-width of the voxel tile.

    Prefers a multiple of 128 that divides S, keeps the (rows, tile_s) f32 output
    block <= max_block_bytes, and yields >= target_steps total grid steps (so v7x's
    two TensorCores both get balanced work and the pipeline overlaps DMA).
    """
    cap = max(128, max_block_bytes // (rows * 4))
    cands = [t for t in range(128, min(S, cap) + 1, 128) if S % t == 0]
    if not cands:
        # No lane-dense divisor available: fall back to the full per-sample voxel
        # axis (block dim == array dim is always legal).  Fine for small volumes.
        return S
    for min_steps in (target_steps, 4, 2, 1):
        good = [t for t in cands if n_batch * (S // t) >= min_steps]
        if good:
            return max(good)
    return max(cands)


# ------------------------------ Kernel wrapper ------------------------------ #

def conv_transpose3d_2x2(x, w, b):
    """ConvTranspose3d(kernel_size=2, stride=2), PyTorch semantics.

    x: (N, Cin, D, H, W) float32
    w: (Cin, Cout, 2, 2, 2)   (PyTorch ConvTranspose3d weight layout)
    b: (Cout,)
    returns (N, Cout, 2D, 2H, 2W)
    """
    N, Cin, D, H, W = x.shape
    Cout = w.shape[1]
    S = D * H * W
    R = 8 * Cout                      # rows = (kd, kh, kw, cout); multiple of 8

    # Native-layout input: (N, Cin, D, H, W) -> (N, Cin, S) is a free reshape.
    x3 = x.reshape(N, Cin, S)
    # Weight -> (kd, kh, kw, cout, cin) -> (8*Cout, Cin).  Tiny, stays VMEM-resident.
    w_mat = jnp.transpose(w, (2, 3, 4, 1, 0)).reshape(R, Cin)
    # Bias replicated once per tap, as a column (broadcasts along lanes in-kernel).
    b_col = jnp.tile(b, 8).reshape(R, 1)

    tile_s = _pick_tile_s(S, N, R)
    grid = (N, S // tile_s)

    out = pl.pallas_call(
        _upsample_kernel,
        out_shape=jax.ShapeDtypeStruct((N, R, S), jnp.float32),
        grid_spec=pltpu.PrefetchScalarGridSpec(
            num_scalar_prefetch=0,
            grid=grid,
            in_specs=[
                pl.BlockSpec((None, Cin, tile_s), lambda n, s: (n, 0, s)),
                pl.BlockSpec((R, Cin), lambda n, s: (0, 0)),   # fetched once
                pl.BlockSpec((R, 1), lambda n, s: (0, 0)),     # fetched once
            ],
            out_specs=pl.BlockSpec((None, R, tile_s), lambda n, s: (n, 0, s)),
        ),
        compiler_params=pltpu.CompilerParams(
            dimension_semantics=("parallel", "parallel"),
            # vmem_limit_bytes intentionally left at the default (kernel uses ~1-2 MiB).
        ),
    )(x3, w_mat, b_col)

    # (N, 8*Cout, S): split axes (free) -> ONE transpose (the only XLA copy pass over
    # the output) -> merge axes (free) -> NCDHW.
    y = out.reshape(N, 2, 2, 2, Cout, D, H, W)          # (n, kd, kh, kw, co, d, h, w)
    y = jnp.transpose(y, (0, 4, 5, 1, 6, 2, 7, 3))      # (n, co, d, kd, h, kh, w, kw)
    return y.reshape(N, Cout, 2 * D, 2 * H, 2 * W)


# ------------------------- Pure-JAX reference check ------------------------- #

def upsample_ref(x, w, b):
    """Exact f32 elementwise reference (no dot -> no TPU matmul-precision ambiguity)."""
    N, Cin, D, H, W = x.shape
    Cout = w.shape[1]
    xb = x[:, :, None, :, None, :, None, :, None]        # (N,Cin,1,D,1,H,1,W,1)
    wb = w[None, :, :, None, :, None, :, None, :]        # (1,Cin,Cout,1,2,1,2,1,2)
    y = jnp.sum(xb * wb, axis=1)                         # (N,Cout,D,2,H,2,W,2)
    y = y.reshape(N, Cout, 2 * D, 2 * H, 2 * W)
    return y + b[None, :, None, None, None]


# ----------------------------------- Main ----------------------------------- #

if __name__ == "__main__":
    key = jax.random.PRNGKey(0)
    k_x, k_w, k_b = jax.random.split(key, 3)

    N, Cin, Cout = 2, 4, 16
    D = H = W = 16

    # PyTorch-style ConvTranspose3d parameters: weight (Cin, Cout, 2, 2, 2), bias (Cout,)
    bound = 1.0 / jnp.sqrt(jnp.float32(Cin * 8))
    weight = jax.random.uniform(k_w, (Cin, Cout, 2, 2, 2), jnp.float32,
                                minval=-bound, maxval=bound)
    bias = jax.random.uniform(k_b, (Cout,), jnp.float32, minval=-bound, maxval=bound)

    # NCDHW input, as the PyTorch module expects.
    x = jax.random.normal(k_x, (N, Cin, D, H, W), jnp.float32)

    fwd = jax.jit(functools.partial(conv_transpose3d_2x2, w=weight, b=bias))
    out = jax.block_until_ready(fwd(x))
    assert out.shape == (N, Cout, 2 * D, 2 * H, 2 * W), out.shape

    ref = upsample_ref(x, weight, bias)
    max_err = float(jnp.max(jnp.abs(out - ref)))
    if max_err > 1e-3:
        raise AssertionError(f"mismatch vs reference: max abs err = {max_err}")

    print("KERNEL_OK")
</pallas_src>

<mosaic_0001>
module attributes {stable_mosaic.version = 11 : i64} {
  func.func @_upsample_kernel(%arg0: i32, %arg1: i32, %arg2: memref<1x4x1024xf32, #tpu.memory_space<vmem>>, %arg3: memref<128x4xf32, #tpu.memory_space<vmem>>, %arg4: memref<128x1xf32, #tpu.memory_space<vmem>>, %arg5: memref<1x128x1024xf32, #tpu.memory_space<vmem>>) attributes {dimension_semantics = [#tpu.dimension_semantics<parallel>, #tpu.dimension_semantics<parallel>], iteration_bounds = array<i64: 2, 4>, scalar_prefetch = 0 : i64, scratch_operands = 0 : i64, tpu.core_type = #tpu.core_type<tc>, window_params = [{transform_indices = @transform_0, window_bounds = array<i64: 1, 4, 1024>}, {pipeline_mode = #tpu.pipeline_mode<synchronous>, transform_indices = @transform_1, window_bounds = array<i64: 128, 4>}, {pipeline_mode = #tpu.pipeline_mode<synchronous>, transform_indices = @transform_2, window_bounds = array<i64: 128, 1>}, {transform_indices = @transform_3, window_bounds = array<i64: 1, 128, 1024>}]} {
    %c0 = arith.constant 0 : index
    %c0_0 = arith.constant 0 : index
    %0 = vector.load %arg3[%c0, %c0_0] : memref<128x4xf32, #tpu.memory_space<vmem>>, vector<128x4xf32>
    %c0_1 = arith.constant 0 : index
    %c0_2 = arith.constant 0 : index
    %c0_3 = arith.constant 0 : index
    %1 = vector.load %arg2[%c0_1, %c0_2, %c0_3] : memref<1x4x1024xf32, #tpu.memory_space<vmem>>, vector<1x4x1024xf32>
    %2 = vector.shape_cast %1 : vector<1x4x1024xf32> to vector<4x1024xf32>
    %cst = arith.constant dense<0.000000e+00> : vector<128x1024xf32>
    %3 = tpu.matmul %0, %2, %cst {dimension_numbers = #tpu.dot_dimension_numbers<[1], [0], [0], [1], [0, 0, 1, 1], [], []>} : vector<128x4xf32>, vector<4x1024xf32>, vector<128x1024xf32> -> vector<128x1024xf32>
    %c0_4 = arith.constant 0 : index
    %c0_5 = arith.constant 0 : index
    %4 = vector.load %arg4[%c0_4, %c0_5] : memref<128x1xf32, #tpu.memory_space<vmem>>, vector<128x1xf32>
    %5 = vector.broadcast %4 : vector<128x1xf32> to vector<128x1024xf32>
    %6 = arith.addf %3, %5 : vector<128x1024xf32>
    %c0_6 = arith.constant 0 : index
    %c0_7 = arith.constant 0 : index
    %c0_8 = arith.constant 0 : index
    %7 = vector.load %arg5[%c0_6, %c0_7, %c0_8] : memref<1x128x1024xf32, #tpu.memory_space<vmem>>, vector<1x128x1024xf32>
    %8 = vector.shape_cast %7 : vector<1x128x1024xf32> to vector<128x1024xf32>
    %9 = vector.shape_cast %6 : vector<128x1024xf32> to vector<1x128x1024xf32>
    tpu.vector_store %arg5[%c0_6, %c0_7, %c0_8], %9 {strides = array<i32>} : memref<1x128x1024xf32, #tpu.memory_space<vmem>>, vector<1x128x1024xf32>,
    return
  }
  func.func @transform_0(%arg0: i32, %arg1: i32) -> (i32, i32, i32) {
    %c0_i32 = arith.constant 0 : i32
    %c0_i32_0 = arith.constant 0 : i32
    return %arg0, %c0_i32, %arg1 : i32, i32, i32
  }
  func.func @transform_1(%arg0: i32, %arg1: i32) -> (i32, i32) {
    %c0_i32 = arith.constant 0 : i32
    %c0_i32_0 = arith.constant 0 : i32
    %c0_i32_1 = arith.constant 0 : i32
    return %c0_i32, %c0_i32_0 : i32, i32
  }
  func.func @transform_2(%arg0: i32, %arg1: i32) -> (i32, i32) {
    %c0_i32 = arith.constant 0 : i32
    %c0_i32_0 = arith.constant 0 : i32
    %c0_i32_1 = arith.constant 0 : i32
    return %c0_i32, %c0_i32_0 : i32, i32
  }
  func.func @transform_3(%arg0: i32, %arg1: i32) -> (i32, i32, i32) {
    %c0_i32 = arith.constant 0 : i32
    %c0_i32_0 = arith.constant 0 : i32
    return %arg0, %c0_i32, %arg1 : i32, i32, i32
  }
}

</mosaic_0001>

<llo_original>
// kernel: tile.6
$region0: #{tile.6}
  #allocation2 [shape = 's32[1]{0}', space=sflag, size = 0x4, scoped, tag = 'scoped memory for tile.6']
  %s0 = inlined_call_operand.hbm [shape: f32[16], index: 0, kind: input, shape index: {}]
  %s1 = inlined_call_operand.vmem [shape: f32[8,16], index: 1, kind: output, shape index: {}]
  $region1: #{tile.6} parent=0
    #allocation0 [shape = 'u8[512]{0}', space=vmem, size = 0x400, scoped, tag = 'operand span for operand 0']
    #allocation1 [shape = 's32[1]{0}', space=sflag, size = 0x4, scoped, tag = 'scoped memory for tile.6']
    %2 = vsyncpa [#allocation1], 0
    // Predicated region
    $region2: #{tile.6} parent=1 // pred_check
      _
    $region3: #{tile.6} parent=1 // pred_check_branch
      %4 = sbr.rel (0) target = $region5
    $region4: #{tile.6} parent=1 // pred_region
      %6 = vsyncadd [#allocation1], 0
      %s8 = sshll.u32 %s0, 4
      %s9 = int_to_ptr.hbm [resolvable:$true] %s8
      %s10 = sshll.u32 [#allocation0], 4
      %s11 = int_to_ptr.vmem [resolvable:$true] %s10
      %13 = dma.hbm_to_vmem [thread:$0]  %s9, 16, %s11, [#allocation1]
    $region5: #{tile.6} parent=1 // pred_fallthru
      _
    // Predicated region
    $region6: #{tile.6} parent=1 // pred_check
      _
    $region7: #{tile.6} parent=1 // pred_check_branch
      %15 = sbr.rel (0) target = $region9
    $region8: #{tile.6} parent=1 // pred_region
      %17 = dma.done [#allocation1], 16
    $region9: #{tile.6} parent=1 // pred_fallthru
      _
    %v18 = vld [vmem:[#allocation0] ss:$0 sm:$0xff]
    %19 = vst [vmem:[%s1] sm:$0xff] %v18
    %20 = vsyncpa [#allocation1], 1

// kernel: tile.0
$region0: #{tile.0}
  %s0 = inlined_call_operand.vmem [shape: f32[8,16], index: 0, kind: input, shape index: {}]
  %s1 = inlined_call_operand.vmem [shape: f32[128,1], index: 1, kind: output, shape index: {}]
  %v2 = vld [vmem:[%s0] sm:$0xff]
  %vm3 = vcmask 7168
  %4 = vst.msk [vmem:[%s1] ss:$16 sm:$0x3] %vm3, %v2
  %5 = vst.msk [vmem:[%s1] ss:$16 sm:$0xc] %vm3, %v2
  %6 = vst.msk [vmem:[%s1] ss:$16 sm:$0x30] %vm3, %v2
  %7 = vst.msk [vmem:[%s1] ss:$16 sm:$0xc0] %vm3, %v2
  %v8 = vld [vmem:[%s0] sm:$0xff]
  %9 = vrot.lane.b32.xlu0 %v8, 127
  %v10 = vpop.permute.xlu0 %9
  %vm11 = vcmask 7168
  %s12 = scalar_lea.vmem %s1, 1
  %13 = vst.msk [vmem:[%s12] ss:$16 sm:$0x3] %vm11, %v10
  %s14 = scalar_lea.vmem %s1, 1
  %15 = vst.msk [vmem:[%s14] ss:$16 sm:$0xc] %vm11, %v10
  %s16 = scalar_lea.vmem %s1, 1
  %17 = vst.msk [vmem:[%s16] ss:$16 sm:$0x30] %vm11, %v10
  %s18 = scalar_lea.vmem %s1, 1
  %19 = vst.msk [vmem:[%s18] ss:$16 sm:$0xc0] %vm11, %v10
  %v20 = vld [vmem:[%s0] sm:$0xff]
  %21 = vrot.lane.b32.xlu0 %v20, 126
  %v22 = vpop.permute.xlu0 %21
  %vm23 = vcmask 7168
  %s24 = scalar_lea.vmem %s1, 2
  %25 = vst.msk [vmem:[%s24] ss:$16 sm:$0x3] %vm23, %v22
  %s26 = scalar_lea.vmem %s1, 2
  %27 = vst.msk [vmem:[%s26] ss:$16 sm:$0xc] %vm23, %v22
  %s28 = scalar_lea.vmem %s1, 2
  %29 = vst.msk [vmem:[%s28] ss:$16 sm:$0x30] %vm23, %v22
  %s30 = scalar_lea.vmem %s1, 2
  %31 = vst.msk [vmem:[%s30] ss:$16 sm:$0xc0] %vm23, %v22
  %v32 = vld [vmem:[%s0] sm:$0xff]
  %33 = vrot.lane.b32.xlu0 %v32, 125
  %v34 = vpop.permute.xlu0 %33
  %vm35 = vcmask 7168
  %s36 = scalar_lea.vmem %s1, 3
  %37 = vst.msk [vmem:[%s36] ss:$16 sm:$0x3] %vm35, %v34
  %s38 = scalar_lea.vmem %s1, 3
  %39 = vst.msk [vmem:[%s38] ss:$16 sm:$0xc] %vm35, %v34
  %s40 = scalar_lea.vmem %s1, 3
  %41 = vst.msk [vmem:[%s40] ss:$16 sm:$0x30] %vm35, %v34
  %s42 = scalar_lea.vmem %s1, 3
  %43 = vst.msk [vmem:[%s42] ss:$16 sm:$0xc0] %vm35, %v34
  %v44 = vld [vmem:[%s0] sm:$0xff]
  %45 = vrot.lane.b32.xlu0 %v44, 124
  %v46 = vpop.permute.xlu0 %45
  %vm47 = vcmask 7168
  %s48 = scalar_lea.vmem %s1, 4
  %49 = vst.msk [vmem:[%s48] ss:$16 sm:$0x3] %vm47, %v46
  %s50 = scalar_lea.vmem %s1, 4
  %51 = vst.msk [vmem:[%s50] ss:$16 sm:$0xc] %vm47, %v46
  %s52 = scalar_lea.vmem %s1, 4
  %53 = vst.msk [vmem:[%s52] ss:$16 sm:$0x30] %vm47, %v46
  %s54 = scalar_lea.vmem %s1, 4
  %55 = vst.msk [vmem:[%s54] ss:$16 sm:$0xc0] %vm47, %v46
  %v56 = vld [vmem:[%s0] sm:$0xff]
  %57 = vrot.lane.b32.xlu0 %v56, 123
  %v58 = vpop.permute.xlu0 %57
  %vm59 = vcmask 7168
  %s60 = scalar_lea.vmem %s1, 5
  %61 = vst.msk [vmem:[%s60] ss:$16 sm:$0x3] %vm59, %v58
  %s62 = scalar_lea.vmem %s1, 5
  %63 = vst.msk [vmem:[%s62] ss:$16 sm:$0xc] %vm59, %v58
  %s64 = scalar_lea.vmem %s1, 5
  %65 = vst.msk [vmem:[%s64] ss:$16 sm:$0x30] %vm59, %v58
  %s66 = scalar_lea.vmem %s1, 5
  %67 = vst.msk [vmem:[%s66] ss:$16 sm:$0xc0] %vm59, %v58
  %v68 = vld [vmem:[%s0] sm:$0xff]
  %69 = vrot.lane.b32.xlu0 %v68, 122
  %v70 = vpop.permute.xlu0 %69
  %vm71 = vcmask 7168
  %s72 = scalar_lea.vmem %s1, 6
  %73 = vst.msk [vmem:[%s72] ss:$16 sm:$0x3] %vm71, %v70
  %s74 = scalar_lea.vmem %s1, 6
  %75 = vst.msk [vmem:[%s74] ss:$16 sm:$0xc] %vm71, %v70
  %s76 = scalar_lea.vmem %s1, 6
  %77 = vst.msk [vmem:[%s76] ss:$16 sm:$0x30] %vm71, %v70
  %s78 = scalar_lea.vmem %s1, 6
  %79 = vst.msk [vmem:[%s78] ss:$16 sm:$0xc0] %vm71, %v70
  %v80 = vld [vmem:[%s0] sm:$0xff]
  %81 = vrot.lane.b32.xlu0 %v80, 121
  %v82 = vpop.permute.xlu0 %81
  %vm83 = vcmask 7168
  %s84 = scalar_lea.vmem %s1, 7
  %85 = vst.msk [vmem:[%s84] ss:$16 sm:$0x3] %vm83, %v82
  %s86 = scalar_lea.vmem %s1, 7
  %87 = vst.msk [vmem:[%s86] ss:$16 sm:$0xc] %vm83, %v82
  %s88 = scalar_lea.vmem %s1, 7
  %89 = vst.msk [vmem:[%s88] ss:$16 sm:$0x30] %vm83, %v82
  %s90 = scalar_lea.vmem %s1, 7
  %91 = vst.msk [vmem:[%s90] ss:$16 sm:$0xc0] %vm83, %v82
  %v92 = vld [vmem:[%s0] sm:$0xff]
  %93 = vrot.lane.b32.xlu0 %v92, 120
  %v94 = vpop.permute.xlu0 %93
  %vm95 = vcmask 7168
  %s96 = scalar_lea.vmem %s1, 8
  %97 = vst.msk [vmem:[%s96] ss:$16 sm:$0x3] %vm95, %v94
  %s98 = scalar_lea.vmem %s1, 8
  %99 = vst.msk [vmem:[%s98] ss:$16 sm:$0xc] %vm95, %v94
  %s100 = scalar_lea.vmem %s1, 8
  %101 = vst.msk [vmem:[%s100] ss:$16 sm:$0x30] %vm95, %v94
  %s102 = scalar_lea.vmem %s1, 8
  %103 = vst.msk [vmem:[%s102] ss:$16 sm:$0xc0] %vm95, %v94
  %v104 = vld [vmem:[%s0] sm:$0xff]
  %105 = vrot.lane.b32.xlu0 %v104, 119
  %v106 = vpop.permute.xlu0 %105
  %vm107 = vcmask 7168
  %s108 = scalar_lea.vmem %s1, 9
  %109 = vst.msk [vmem:[%s108] ss:$16 sm:$0x3] %vm107, %v106
  %s110 = scalar_lea.vmem %s1, 9
  %111 = vst.msk [vmem:[%s110] ss:$16 sm:$0xc] %vm107, %v106
  %s112 = scalar_lea.vmem %s1, 9
  %113 = vst.msk [vmem:[%s112] ss:$16 sm:$0x30] %vm107, %v106
  %s114 = scalar_lea.vmem %s1, 9
  %115 = vst.msk [vmem:[%s114] ss:$16 sm:$0xc0] %vm107, %v106
  %v116 = vld [vmem:[%s0] sm:$0xff]
  %117 = vrot.lane.b32.xlu0 %v116, 118
  %v118 = vpop.permute.xlu0 %117
  %vm119 = vcmask 7168
  %s120 = scalar_lea.vmem %s1, 10
  %121 = vst.msk [vmem:[%s120] ss:$16 sm:$0x3] %vm119, %v118
  %s122 = scalar_lea.vmem %s1, 10
  %123 = vst.msk [vmem:[%s122] ss:$16 sm:$0xc] %vm119, %v118
  %s124 = scalar_lea.vmem %s1, 10
  %125 = vst.msk [vmem:[%s124] ss:$16 sm:$0x30] %vm119, %v118
  %s126 = scalar_lea.vmem %s1, 10
  %127 = vst.msk [vmem:[%s126] ss:$16 sm:$0xc0] %vm119, %v118
  %v128 = vld [vmem:[%s0] sm:$0xff]
  %129 = vrot.lane.b32.xlu0 %v128, 117
  %v130 = vpop.permute.xlu0 %129
  %vm131 = vcmask 7168
  %s132 = scalar_lea.vmem %s1, 11
  %133 = vst.msk [vmem:[%s132] ss:$16 sm:$0x3] %vm131, %v130
  %s134 = scalar_lea.vmem %s1, 11
  %135 = vst.msk [vmem:[%s134] ss:$16 sm:$0xc] %vm131, %v130
  %s136 = scalar_lea.vmem %s1, 11
  %137 = vst.msk [vmem:[%s136] ss:$16 sm:$0x30] %vm131, %v130
  %s138 = scalar_lea.vmem %s1, 11
  %139 = vst.msk [vmem:[%s138] ss:$16 sm:$0xc0] %vm131, %v130
  %v140 = vld [vmem:[%s0] sm:$0xff]
  %141 = vrot.lane.b32.xlu0 %v140, 116
  %v142 = vpop.permute.xlu0 %141
  %vm143 = vcmask 7168
  %s144 = scalar_lea.vmem %s1, 12
  %145 = vst.msk [vmem:[%s144] ss:$16 sm:$0x3] %vm143, %v142
  %s146 = scalar_lea.vmem %s1, 12
  %147 = vst.msk [vmem:[%s146] ss:$16 sm:$0xc] %vm143, %v142
  %s148 = scalar_lea.vmem %s1, 12
  %149 = vst.msk [vmem:[%s148] ss:$16 sm:$0x30] %vm143, %v142
  %s150 = scalar_lea.vmem %s1, 12
  %151 = vst.msk [vmem:[%s150] ss:$16 sm:$0xc0] %vm143, %v142
  %v152 = vld [vmem:[%s0] sm:$0xff]
  %153 = vrot.lane.b32.xlu0 %v152, 115
  %v154 = vpop.permute.xlu0 %153
  %vm155 = vcmask 7168
  %s156 = scalar_lea.vmem %s1, 13
  %157 = vst.msk [vmem:[%s156] ss:$16 sm:$0x3] %vm155, %v154
  %s158 = scalar_lea.vmem %s1, 13
  %159 = vst.msk [vmem:[%s158] ss:$16 sm:$0xc] %vm155, %v154
  %s160 = scalar_lea.vmem %s1, 13
  %161 = vst.msk [vmem:[%s160] ss:$16 sm:$0x30] %vm155, %v154
  %s162 = scalar_lea.vmem %s1, 13
  %163 = vst.msk [vmem:[%s162] ss:$16 sm:$0xc0] %vm155, %v154
  %v164 = vld [vmem:[%s0] sm:$0xff]
  %165 = vrot.lane.b32.xlu0 %v164, 114
  %v166 = vpop.permute.xlu0 %165
  %vm167 = vcmask 7168
  %s168 = scalar_lea.vmem %s1, 14
  %169 = vst.msk [vmem:[%s168] ss:$16 sm:$0x3] %vm167, %v166
  %s170 = scalar_lea.vmem %s1, 14
  %171 = vst.msk [vmem:[%s170] ss:$16 sm:$0xc] %vm167, %v166
  %s172 = scalar_lea.vmem %s1, 14
  %173 = vst.msk [vmem:[%s172] ss:$16 sm:$0x30] %vm167, %v166
  %s174 = scalar_lea.vmem %s1, 14
  %175 = vst.msk [vmem:[%s174] ss:$16 sm:$0xc0] %vm167, %v166
  %v176 = vld [vmem:[%s0] sm:$0xff]
  %177 = vrot.lane.b32.xlu0 %v176, 113
  %v178 = vpop.permute.xlu0 %177
  %vm179 = vcmask 7168
  %s180 = scalar_lea.vmem %s1, 15
  %181 = vst.msk [vmem:[%s180] ss:$16 sm:$0x3] %vm179, %v178
  %s182 = scalar_lea.vmem %s1, 15
  %183 = vst.msk [vmem:[%s182] ss:$16 sm:$0xc] %vm179, %v178
  %s184 = scalar_lea.vmem %s1, 15
  %185 = vst.msk [vmem:[%s184] ss:$16 sm:$0x30] %vm179, %v178
  %s186 = scalar_lea.vmem %s1, 15
  %187 = vst.msk [vmem:[%s186] ss:$16 sm:$0xc0] %vm179, %v178

// kernel: conv_transpose3d_2x2.1
$region0: #{conv_transpose3d_2x2.1}
  #allocation0 [shape = 'u32[]', space=smem, size = 0x4, offset = 0x4, fixed_abs, tag = 'smem constant byte address 0x4 - core index']
  #allocation1 [shape = 'u32[72,128]{1,0:T(1,128)}', space=vmem, size = 0x9000, scoped, tag = 'internal scratch']
  %s0 = inlined_call_operand.vmem [shape: f32[2,4,4096], index: 0, kind: input, shape index: {}]
  %s1 = inlined_call_operand.hbm [shape: f32[128,4], index: 1, kind: input, shape index: {}]
  %s2 = inlined_call_operand.vmem [shape: f32[128,1], index: 2, kind: input, shape index: {}]
  %s3 = inlined_call_operand.vmem [shape: f32[2,128,4096], index: 3, kind: output, shape index: {}]
  %s4 = sld [smem:[#allocation0]]
  $region68: #{conv_transpose3d_2x2.1} parent=0
    _
  %s6 = ssub.s32 1, %s4
  %s7 = scalar_select 0, %s6, %s4
  $region1: #{conv_transpose3d_2x2.1} parent=0
    #allocation2 [shape = 'u8[65536]{0}', space=vmem, size = 0x10000, scoped, tag = 'input window, operand 1, single buffered']
    #allocation3 [shape = 's32[2]{0}', space=sflag, size = 0x8, scoped, tag = 'scoped memory for conv_transpose3d_2x2.1']
    #allocation4 [shape = 'u8[1048576]{0}', space=vmem, size = 0x100000, scoped, tag = 'output window, operand 0']
    %8 = vsyncpa [#allocation3], 0
    loop: start=0, step=1, limit=10
    $region2: #{conv_transpose3d_2x2.1} parent=1 // loop_pre_header
      _
    $region3: #{conv_transpose3d_2x2.1} parent=1 // loop_header
      %s10 = sphi 0, %s14
      %p11 = scmp.ge.s32.totalorder %s10, 10
      %s17 = sphi 0, %s29
      %s18 = sphi 0, %s25
      %s19 = sphi 0, %s17
      %s20 = sphi 0, %s18
      %s21 = sphi 0, %s19
      %s22 = sphi 0, %s20
      %s34 = sphi 0, %s36
      %s37 = sphi 0, %s34
      %s38 = sphi 0, %s37
      %s54 = sphi 0, %s38
      %s58 = sphi 0, %s58
      %s60 = sphi 0, %s58
      %s61 = sphi 0, %s60
      %s75 = sphi 0, %s61
      %s79 = sphi 0, %s79
      %s81 = sphi 0, %s79
      %s82 = sphi 0, %s81
      %s96 = sphi 0, %s82
      %s104 = sphi 0, %s106
      %s107 = sphi 0, %s104
      %s108 = sphi 0, %s107
      %s124 = sphi 0, %s108
    $region4: #{conv_transpose3d_2x2.1} parent=1 // loop_header_branch
      %13 = sbr.rel (%p11) target = $region8
    $region5: #{conv_transpose3d_2x2.1} parent=1 // loop_body
      %s15 = ssub.s32 %s10, 1
      %s16 = ssub.s32 %s10, 2
      %s23 = sadd.s32 1, %s18
      %p24 = scmp.ge.s32.totalorder %s23, 4
      %s25 = scalar_select %p24, 0, %s23
      %s26 = sadd.s32 1, %s17
      %s27 = scalar_select %p24, %s26, %s17
      %p28 = scmp.ge.s32.totalorder %s27, 2
      %s29 = scalar_select %p28, 0, %s27
      %s30 = ssub.s32 %s17, %s29
      %s31 = ssub.s32 %s18, %s25
      %s32 = sor.u32 %s30, %s31
      %p33 = scmp.eq.s32.totalorder %s32, 0
      %s35 = sadd.s32 %s34, 1
      %s36 = scalar_select %p33, %s34, %s35
      %p39 = pneg %p33
      %p40 = scmp.eq.s32.totalorder %s10, 7
      %p41 = por %p39, %p40
      %p42 = scmp.ne.s32.totalorder %s34, %s37
      %p43 = scmp.eq.s32.totalorder %s10, 0
      %p44 = por %p42, %p43
      %p45 = scmp.ne.s32.totalorder %s34, %s37
      %p46 = scmp.eq.s32.totalorder %s15, 7
      %p47 = por %p45, %p46
      %p48 = scmp.ne.s32.totalorder %s37, %s38
      %p49 = scmp.eq.s32.totalorder %s15, 0
      %p50 = por %p48, %p49
      %p51 = scmp.ne.s32.totalorder %s37, %s38
      %p52 = scmp.eq.s32.totalorder %s16, 7
      %p53 = por %p51, %p52
      %p55 = scmp.ne.s32.totalorder %s38, %s54
      %p56 = scmp.eq.s32.totalorder %s16, 0
      %p57 = por %p55, %p56
      %s59 = sadd.s32 %s58, 1
      %p62 = scmp.eq.s32.totalorder %s10, 7
      %p63 = scmp.ne.s32.totalorder %s58, %s60
      %p64 = scmp.eq.s32.totalorder %s10, 0
      %p65 = por %p63, %p64
      %p66 = scmp.ne.s32.totalorder %s58, %s60
      %p67 = scmp.eq.s32.totalorder %s15, 7
      %p68 = por %p66, %p67
      %p69 = scmp.ne.s32.totalorder %s60, %s61
      %p70 = scmp.eq.s32.totalorder %s15, 0
      %p71 = por %p69, %p70
      %p72 = scmp.ne.s32.totalorder %s60, %s61
      %p73 = scmp.eq.s32.totalorder %s16, 7
      %p74 = por %p72, %p73
      %p76 = scmp.ne.s32.totalorder %s61, %s75
      %p77 = scmp.eq.s32.totalorder %s16, 0
      %p78 = por %p76, %p77
      %s80 = sadd.s32 %s79, 1
      %p83 = scmp.eq.s32.totalorder %s10, 7
      %p84 = scmp.ne.s32.totalorder %s79, %s81
      %p85 = scmp.eq.s32.totalorder %s10, 0
      %p86 = por %p84, %p85
      %p87 = scmp.ne.s32.totalorder %s79, %s81
      %p88 = scmp.eq.s32.totalorder %s15, 7
      %p89 = por %p87, %p88
      %p90 = scmp.ne.s32.totalorder %s81, %s82
      %p91 = scmp.eq.s32.totalorder %s15, 0
      %p92 = por %p90, %p91
      %p93 = scmp.ne.s32.totalorder %s81, %s82
      %p94 = scmp.eq.s32.totalorder %s16, 7
      %p95 = por %p93, %p94
      %p97 = scmp.ne.s32.totalorder %s82, %s96
      %p98 = scmp.eq.s32.totalorder %s16, 0
      %p99 = por %p97, %p98
      %s100 = ssub.s32 %s17, %s29
      %s101 = ssub.s32 %s18, %s25
      %s102 = sor.u32 %s100, %s101
      %p103 = scmp.eq.s32.totalorder %s102, 0
      %s105 = sadd.s32 %s104, 1
      %s106 = scalar_select %p103, %s104, %s105
      %p109 = pneg %p103
      %p110 = scmp.eq.s32.totalorder %s10, 7
      %p111 = por %p109, %p110
      %p112 = scmp.ne.s32.totalorder %s104, %s107
      %p113 = scmp.eq.s32.totalorder %s10, 0
      %p114 = por %p112, %p113
      %p115 = scmp.ne.s32.totalorder %s104, %s107
      %p116 = scmp.eq.s32.totalorder %s15, 7
      %p117 = por %p115, %p116
      %p118 = scmp.ne.s32.totalorder %s107, %s108
      %p119 = scmp.eq.s32.totalorder %s15, 0
      %p120 = por %p118, %p119
      %p121 = scmp.ne.s32.totalorder %s107, %s108
      %p122 = scmp.eq.s32.totalorder %s16, 7
      %p123 = por %p121, %p122
      %p125 = scmp.ne.s32.totalorder %s108, %s124
      %p126 = scmp.eq.s32.totalorder %s16, 0
      %p127 = por %p125, %p126
      %p128 = scmp.le.s32.totalorder 1, %s10
      %p129 = scmp.lt.s32.totalorder %s10, 9
      %p130 = pnand %p128, %p129
      %p131 = pneg %p130
      // Predicated region
      $region9: #{conv_transpose3d_2x2.1} parent=5 // pred_check
        _
      $region10: #{conv_transpose3d_2x2.1} parent=5 // pred_check_branch
        %133 = sbr.rel (%p130) target = $region12
      $region11: #{conv_transpose3d_2x2.1} parent=5 // pred_region
        %s134 = ssub.s32 %s10, 1
        // Predicated region
        $region13: #{conv_transpose3d_2x2.1} parent=11 // pred_check
          %p135 = pneg %p71
        $region14: #{conv_transpose3d_2x2.1} parent=11 // pred_check_branch
          %137 = sbr.rel (%p135) target = $region16
        $region15: #{conv_transpose3d_2x2.1} parent=11 // pred_region
          %139 = vsyncadd [#allocation3], 0
          %s140 = sshll.u32 %s1, 4
          %s141 = int_to_ptr.hbm [resolvable:$true] %s140
          %s142 = sshll.u32 [#allocation2], 4
          %s143 = int_to_ptr.vmem [resolvable:$true] %s142
          %148 = dma.hbm_to_vmem [thread:$0]  %s141, 2048, %s143, [#allocation3], 128, 128, 8
        $region16: #{conv_transpose3d_2x2.1} parent=11 // pred_fallthru
          _
        // Predicated region
        $region17: #{conv_transpose3d_2x2.1} parent=11 // pred_check
          %p149 = pneg %p92
        $region18: #{conv_transpose3d_2x2.1} parent=11 // pred_check_branch
          %151 = sbr.rel (%p149) target = $region20
        $region19: #{conv_transpose3d_2x2.1} parent=11 // pred_region
          _
        $region20: #{conv_transpose3d_2x2.1} parent=11 // pred_fallthru
          _
      $region12: #{conv_transpose3d_2x2.1} parent=5 // pred_fallthru
        _
      %p152 = scmp.lt.s32.totalorder %s10, 8
      // Predicated region
      $region21: #{conv_transpose3d_2x2.1} parent=5 // pred_check
        %p153 = pneg %p152
      $region22: #{conv_transpose3d_2x2.1} parent=5 // pred_check_branch
        %155 = sbr.rel (%p153) target = $region24
      $region23: #{conv_transpose3d_2x2.1} parent=5 // pred_region
        // Predicated region
        $region25: #{conv_transpose3d_2x2.1} parent=23 // pred_check
          %p156 = pneg %p44
        $region26: #{conv_transpose3d_2x2.1} parent=23 // pred_check_branch
          %158 = sbr.rel (%p156) target = $region28
        $region27: #{conv_transpose3d_2x2.1} parent=23 // pred_region
          %s159 = smul.u32 8, %s18
          %p160 = scmp.lt.s32.totalorder %s17, 1
          %s161 = scalar_select %p160, %s17, 1
          %p162 = scmp.lt.s32.totalorder %s159, 31
          %s163 = scalar_select %p162, %s159, 31
          %s164 = smul.addr %s161, 32
          %s165 = sadd.s32 %s163, %s164
          %s166 = smul.addr %s165, 4
          %s167 = scalar_lea.vmem %s0, %s166
          %s168 = smul.u32 8, %s18
        $region28: #{conv_transpose3d_2x2.1} parent=23 // pred_fallthru
          _
      $region24: #{conv_transpose3d_2x2.1} parent=5 // pred_fallthru
        _
      %p169 = scmp.le.s32.totalorder 1, %s10
      %p170 = scmp.lt.s32.totalorder %s10, 9
      %p171 = pnand %p169, %p170
      %p172 = pneg %p171
      // Predicated region
      $region29: #{conv_transpose3d_2x2.1} parent=5 // pred_check
        _
      $region30: #{conv_transpose3d_2x2.1} parent=5 // pred_check_branch
        %174 = sbr.rel (%p171) target = $region32
      $region31: #{conv_transpose3d_2x2.1} parent=5 // pred_region
        %s175 = ssub.s32 %s10, 1
        // Predicated region
        $region33: #{conv_transpose3d_2x2.1} parent=31 // pred_check
          %p176 = pneg %p71
        $region34: #{conv_transpose3d_2x2.1} parent=31 // pred_check_branch
          %178 = sbr.rel (%p176) target = $region36
        $region35: #{conv_transpose3d_2x2.1} parent=31 // pred_region
          %180 = dma.done [#allocation3], 2048
        $region36: #{conv_transpose3d_2x2.1} parent=31 // pred_fallthru
          _
        %s181 = smul.u32 8, %s20
        %p182 = scmp.lt.s32.totalorder %s19, 1
        %s183 = scalar_select %p182, %s19, 1
        %p184 = scmp.lt.s32.totalorder %s181, 31
        %s185 = scalar_select %p184, %s181, 31
        %s186 = smul.addr %s183, 32
        %s187 = sadd.s32 %s185, %s186
        %s188 = smul.addr %s187, 4
        %s189 = scalar_lea.vmem %s0, %s188
        %p190 = pneg %p50
        %p191 = pneg %p47
        %p192 = pneg %p71
        %p193 = pneg %p68
        %p194 = pneg %p92
        %p195 = pneg %p89
        %p196 = pneg %p120
        %p197 = pneg %p117
        %s198 = sand.u32 %s107, 1
        %s199 = sand.u32 %s107, 1
        %s200 = smul.addr %s199, 1024
        %s201 = scalar_lea.vmem [#allocation4], %s200
        %s202 = smul.u32 8, %s20
        %p203 = scmp.lt.s32.totalorder %s19, 1
        %s204 = scalar_select %p203, %s19, 1
        %p205 = scmp.lt.s32.totalorder %s202, 31
        %s206 = scalar_select %p205, %s202, 31
        %s207 = smul.addr %s204, 32
        %s208 = sadd.s32 %s206, %s207
        %s209 = smul.addr %s208, 4
        %s210 = scalar_lea.vmem %s0, %s209
        %s211 = smul.u32 8, %s20
        %s212 = smul.u32 8, %s20
        %v213 = vld [vmem:[#allocation2] sm:$0xff]
        %v214 = vld [vmem:[#allocation2 + $0x8] sm:$0xff]
        %v215 = vld [vmem:[#allocation2 + $0x10] sm:$0xff]
        %v216 = vld [vmem:[#allocation2 + $0x18] sm:$0xff]
        %v217 = vld [vmem:[#allocation2 + $0x20] sm:$0xff]
        %v218 = vld [vmem:[#allocation2 + $0x28] sm:$0xff]
        %v219 = vld [vmem:[#allocation2 + $0x30] sm:$0xff]
        %v220 = vld [vmem:[#allocation2 + $0x38] sm:$0xff]
        %v221 = vld [vmem:[#allocation2 + $0x40] sm:$0xff]
        %v222 = vld [vmem:[#allocation2 + $0x48] sm:$0xff]
        %v223 = vld [vmem:[#allocation2 + $0x50] sm:$0xff]
        %v224 = vld [vmem:[#allocation2 + $0x58] sm:$0xff]
        %v225 = vld [vmem:[#allocation2 + $0x60] sm:$0xff]
        %v226 = vld [vmem:[#allocation2 + $0x68] sm:$0xff]
        %v227 = vld [vmem:[#allocation2 + $0x70] sm:$0xff]
        %v228 = vld [vmem:[#allocation2 + $0x78] sm:$0xff]
        %v229 = vld [vmem:[%s210] sm:$0xff]
        %v230 = vld [vmem:[%s210 + $0x8] sm:$0xff]
        %v231 = vld [vmem:[%s210 + $0x10] sm:$0xff]
        %v232 = vld [vmem:[%s210 + $0x18] sm:$0xff]
        %v233 = vld [vmem:[%s2] sm:$0xff]
        %v234 = vld [vmem:[%s2 + $0x8] sm:$0xff]
        %v235 = vld [vmem:[%s2 + $0x10] sm:$0xff]
        %v236 = vld [vmem:[%s2 + $0x18] sm:$0xff]
        %v237 = vld [vmem:[%s2 + $0x20] sm:$0xff]
        %v238 = vld [vmem:[%s2 + $0x28] sm:$0xff]
        %v239 = vld [vmem:[%s2 + $0x30] sm:$0xff]
        %v240 = vld [vmem:[%s2 + $0x38] sm:$0xff]
        %v241 = vld [vmem:[%s2 + $0x40] sm:$0xff]
        %v242 = vld [vmem:[%s2 + $0x48] sm:$0xff]
        %v243 = vld [vmem:[%s2 + $0x50] sm:$0xff]
        %v244 = vld [vmem:[%s2 + $0x58] sm:$0xff]
        %v245 = vld [vmem:[%s2 + $0x60] sm:$0xff]
        %v246 = vld [vmem:[%s2 + $0x68] sm:$0xff]
        %v247 = vld [vmem:[%s2 + $0x70] sm:$0xff]
        %v248 = vld [vmem:[%s2 + $0x78] sm:$0xff]
        %250 = vset.pattern.permute.xlu0 0
        %251 = vperm.xlu0 %250, %v233
        %v252 = vpop.permute.xlu0 %251
        %255 = vset.pattern.permute.xlu0 0
        %256 = vperm.xlu0 %255, %v234
        %v257 = vpop.permute.xlu0 %256
        %260 = vset.pattern.permute.xlu0 0
        %261 = vperm.xlu0 %260, %v235
        %v262 = vpop.permute.xlu0 %261
        %265 = vset.pattern.permute.xlu0 0
        %266 = vperm.xlu0 %265, %v236
        %v267 = vpop.permute.xlu0 %266
        %270 = vset.pattern.permute.xlu0 0
        %271 = vperm.xlu0 %270, %v237
        %v272 = vpop.permute.xlu0 %271
        %275 = vset.pattern.permute.xlu0 0
        %276 = vperm.xlu0 %275, %v238
        %v277 = vpop.permute.xlu0 %276
        %280 = vset.pattern.permute.xlu0 0
        %281 = vperm.xlu0 %280, %v239
        %v282 = vpop.permute.xlu0 %281
        %285 = vset.pattern.permute.xlu0 0
        %286 = vperm.xlu0 %285, %v240
        %v287 = vpop.permute.xlu0 %286
        %290 = vset.pattern.permute.xlu0 0
        %291 = vperm.xlu0 %290, %v241
        %v292 = vpop.permute.xlu0 %291
        %295 = vset.pattern.permute.xlu0 0
        %296 = vperm.xlu0 %295, %v242
        %v297 = vpop.permute.xlu0 %296
        %300 = vset.pattern.permute.xlu0 0
        %301 = vperm.xlu0 %300, %v243
        %v302 = vpop.permute.xlu0 %301
        %305 = vset.pattern.permute.xlu0 0
        %306 = vperm.xlu0 %305, %v244
        %v307 = vpop.permute.xlu0 %306
        %310 = vset.pattern.permute.xlu0 0
        %311 = vperm.xlu0 %310, %v245
        %v312 = vpop.permute.xlu0 %311
        %315 = vset.pattern.permute.xlu0 0
        %316 = vperm.xlu0 %315, %v246
        %v317 = vpop.permute.xlu0 %316
        %320 = vset.pattern.permute.xlu0 0
        %321 = vperm.xlu0 %320, %v247
        %v322 = vpop.permute.xlu0 %321
        %325 = vset.pattern.permute.xlu0 0
        %326 = vperm.xlu0 %325, %v248
        %v327 = vpop.permute.xlu0 %326
        %333 = vst [vmem:[#allocation1] ss:$2 sm:$0xff] %v229
        %s334 = scalar_lea.vmem [#allocation1], 16
        %335 = vst [vmem:[%s334] ss:$2 sm:$0xff] %v230
        %s336 = scalar_lea.vmem [#allocation1], 32
        %337 = vst [vmem:[%s336] ss:$2 sm:$0xff] %v231
        %s338 = scalar_lea.vmem [#allocation1], 48
        %339 = vst [vmem:[%s338] ss:$2 sm:$0xff] %v232
        %v340 = vld.sshfl [vmem:[#allocation1] sm:$0xff pattern:$0x75316420]
        %v341 = vld.sshfl [vmem:[#allocation1 + $0x8] sm:$0xff pattern:$0x75316420]
        %v342 = vld.sshfl [vmem:[#allocation1 + $0x10] sm:$0xff pattern:$0x75316420]
        %v343 = vld.sshfl [vmem:[#allocation1 + $0x18] sm:$0xff pattern:$0x75316420]
        %v344 = vld.sshfl [vmem:[#allocation1 + $0x20] sm:$0xff pattern:$0x75316420]
        %v345 = vld.sshfl [vmem:[#allocation1 + $0x28] sm:$0xff pattern:$0x75316420]
        %v346 = vld.sshfl [vmem:[#allocation1 + $0x30] sm:$0xff pattern:$0x75316420]
        %v347 = vld.sshfl [vmem:[#allocation1 + $0x38] sm:$0xff pattern:$0x75316420]
        %vm348 = vcmask 31744
        %v350 = vsel %vm348, %v213, 0
        %v353 = vsel %vm348, %v214, 0
        %v356 = vsel %vm348, %v215, 0
        %v359 = vsel %vm348, %v216, 0
        %v362 = vsel %vm348, %v217, 0
        %v365 = vsel %vm348, %v218, 0
        %v368 = vsel %vm348, %v219, 0
        %v371 = vsel %vm348, %v220, 0
        %v374 = vsel %vm348, %v221, 0
        %v377 = vsel %vm348, %v222, 0
        %v380 = vsel %vm348, %v223, 0
        %v383 = vsel %vm348, %v224, 0
        %v386 = vsel %vm348, %v225, 0
        %v389 = vsel %vm348, %v226, 0
        %v392 = vsel %vm348, %v227, 0
        %v395 = vsel %vm348, %v228, 0
        %vm397 = vcmask 1043456
        %v398 = vsel %vm397, %v340, 0
        %v400 = vsel %vm397, %v341, 0
        %v402 = vsel %vm397, %v342, 0
        %v404 = vsel %vm397, %v343, 0
        %v406 = vsel %vm397, %v344, 0
        %v408 = vsel %vm397, %v345, 0
        %v410 = vsel %vm397, %v346, 0
        %v412 = vsel %vm397, %v347, 0
        %414 = vmatpush.msra.mxu0 0.0
        %415 = vmatpush.msra.mxu0 0.0
        %416 = vmatpush.msra.mxu0 0.0
        %417 = vmatpush.msra.mxu0 0.0
        %418 = vmatpush.msra.mxu0 0.0
        %419 = vmatpush.msra.mxu0 0.0
        %420 = vmatpush.msra.mxu0 0.0
        %421 = vmatpush.msra.mxu0 0.0
        %422 = vmatpush.msra.mxu0 0.0
        %423 = vmatpush.msra.mxu0 0.0
        %424 = vmatpush.msra.mxu0 0.0
        %425 = vmatpush.msra.mxu0 0.0
        %426 = vmatpush.msra.mxu0 0.0
        %427 = vmatpush.msra.mxu0 0.0
        %428 = vmatpush.msra.mxu0 0.0
        %429 = vmatpush.msra.mxu0 %v398
        %430 = vmatmul.f32.gmra.mxu0 %v350
        %v431 = vpop.f32.mrf.mxu0
        %v432 = vadd.f32 %v252, %v431
        %433 = vmatmul.f32.gmra.mxu0 %v353
        %v434 = vpop.f32.mrf.mxu0
        %v435 = vadd.f32 %v257, %v434
        %436 = vmatmul.f32.gmra.mxu0 %v356
        %v437 = vpop.f32.mrf.mxu0
        %v438 = vadd.f32 %v262, %v437
        %439 = vmatmul.f32.gmra.mxu0 %v359
        %v440 = vpop.f32.mrf.mxu0
        %v441 = vadd.f32 %v267, %v440
        %442 = vmatmul.f32.gmra.mxu0 %v362
        %v443 = vpop.f32.mrf.mxu0
        %v444 = vadd.f32 %v272, %v443
        %445 = vmatmul.f32.gmra.mxu0 %v365
        %v446 = vpop.f32.mrf.mxu0
        %v447 = vadd.f32 %v277, %v446
        %448 = vmatmul.f32.gmra.mxu0 %v368
        %v449 = vpop.f32.mrf.mxu0
        %v450 = vadd.f32 %v282, %v449
        %451 = vmatmul.f32.gmra.mxu0 %v371
        %v452 = vpop.f32.mrf.mxu0
        %v453 = vadd.f32 %v287, %v452
        %454 = vmatmul.f32.gmra.mxu0 %v374
        %v455 = vpop.f32.mrf.mxu0
        %v456 = vadd.f32 %v292, %v455
        %457 = vmatmul.f32.gmra.mxu0 %v377
        %v458 = vpop.f32.mrf.mxu0
        %v459 = vadd.f32 %v297, %v458
        %460 = vmatmul.f32.gmra.mxu0 %v380
        %v461 = vpop.f32.mrf.mxu0
        %v462 = vadd.f32 %v302, %v461
        %463 = vmatmul.f32.gmra.mxu0 %v383
        %v464 = vpop.f32.mrf.mxu0
        %v465 = vadd.f32 %v307, %v464
        %466 = vmatmul.f32.gmra.mxu0 %v386
        %v467 = vpop.f32.mrf.mxu0
        %v468 = vadd.f32 %v312, %v467
        %469 = vmatmul.f32.gmra.mxu0 %v389
        %v470 = vpop.f32.mrf.mxu0
        %v471 = vadd.f32 %v317, %v470
        %472 = vmatmul.f32.gmra.mxu0 %v392
        %v473 = vpop.f32.mrf.mxu0
        %v474 = vadd.f32 %v322, %v473
        %475 = vmatmul.f32.gmra.mxu0 %v395
        %v476 = vpop.f32.mrf.mxu0
        %v477 = vadd.f32 %v327, %v476
        %478 = vdwg.mxu0
        %479 = vmatpush.msra.mxu0 0.0
        %480 = vmatpush.msra.mxu0 0.0
        %481 = vmatpush.msra.mxu0 0.0
        %482 = vmatpush.msra.mxu0 0.0
        %483 = vmatpush.msra.mxu0 0.0
        %484 = vmatpush.msra.mxu0 0.0
        %485 = vmatpush.msra.mxu0 0.0
        %486 = vmatpush.msra.mxu0 0.0
        %487 = vmatpush.msra.mxu0 0.0
        %488 = vmatpush.msra.mxu0 0.0
        %489 = vmatpush.msra.mxu0 0.0
        %490 = vmatpush.msra.mxu0 0.0
        %491 = vmatpush.msra.mxu0 0.0
        %492 = vmatpush.msra.mxu0 0.0
        %493 = vmatpush.msra.mxu0 0.0
        %494 = vmatpush.msra.mxu0 %v400
        %495 = vmatmul.f32.gmra.mxu0 %v350
        %v496 = vpop.f32.mrf.mxu0
        %v497 = vadd.f32 %v252, %v496
        %498 = vmatmul.f32.gmra.mxu0 %v353
        %v499 = vpop.f32.mrf.mxu0
        %v500 = vadd.f32 %v257, %v499
        %501 = vmatmul.f32.gmra.mxu0 %v356
        %v502 = vpop.f32.mrf.mxu0
        %v503 = vadd.f32 %v262, %v502
        %504 = vmatmul.f32.gmra.mxu0 %v359
        %v505 = vpop.f32.mrf.mxu0
        %v506 = vadd.f32 %v267, %v505
        %507 = vmatmul.f32.gmra.mxu0 %v362
        %v508 = vpop.f32.mrf.mxu0
        %v509 = vadd.f32 %v272, %v508
        %510 = vmatmul.f32.gmra.mxu0 %v365
        %v511 = vpop.f32.mrf.mxu0
        %v512 = vadd.f32 %v277, %v511
        %513 = vmatmul.f32.gmra.mxu0 %v368
        %v514 = vpop.f32.mrf.mxu0
        %v515 = vadd.f32 %v282, %v514
        %516 = vmatmul.f32.gmra.mxu0 %v371
        %v517 = vpop.f32.mrf.mxu0
        %v518 = vadd.f32 %v287, %v517
        %519 = vmatmul.f32.gmra.mxu0 %v374
        %v520 = vpop.f32.mrf.mxu0
        %v521 = vadd.f32 %v292, %v520
        %522 = vmatmul.f32.gmra.mxu0 %v377
        %v523 = vpop.f32.mrf.mxu0
        %v524 = vadd.f32 %v297, %v523
        %525 = vmatmul.f32.gmra.mxu0 %v380
        %v526 = vpop.f32.mrf.mxu0
        %v527 = vadd.f32 %v302, %v526
        %528 = vmatmul.f32.gmra.mxu0 %v383
        %v529 = vpop.f32.mrf.mxu0
        %v530 = vadd.f32 %v307, %v529
        %531 = vmatmul.f32.gmra.mxu0 %v386
        %v532 = vpop.f32.mrf.mxu0
        %v533 = vadd.f32 %v312, %v532
        %534 = vmatmul.f32.gmra.mxu0 %v389
        %v535 = vpop.f32.mrf.mxu0
        %v536 = vadd.f32 %v317, %v535
        %537 = vmatmul.f32.gmra.mxu0 %v392
        %v538 = vpop.f32.mrf.mxu0
        %v539 = vadd.f32 %v322, %v538
        %540 = vmatmul.f32.gmra.mxu0 %v395
        %v541 = vpop.f32.mrf.mxu0
        %v542 = vadd.f32 %v327, %v541
        %543 = vdwg.mxu0
        %544 = vmatpush.msra.mxu0 0.0
        %545 = vmatpush.msra.mxu0 0.0
        %546 = vmatpush.msra.mxu0 0.0
        %547 = vmatpush.msra.mxu0 0.0
        %548 = vmatpush.msra.mxu0 0.0
        %549 = vmatpush.msra.mxu0 0.0
        %550 = vmatpush.msra.mxu0 0.0
        %551 = vmatpush.msra.mxu0 0.0
        %552 = vmatpush.msra.mxu0 0.0
        %553 = vmatpush.msra.mxu0 0.0
        %554 = vmatpush.msra.mxu0 0.0
        %555 = vmatpush.msra.mxu0 0.0
        %556 = vmatpush.msra.mxu0 0.0
        %557 = vmatpush.msra.mxu0 0.0
        %558 = vmatpush.msra.mxu0 0.0
        %559 = vmatpush.msra.mxu0 %v402
        %560 = vmatmul.f32.gmra.mxu0 %v350
        %v561 = vpop.f32.mrf.mxu0
        %v562 = vadd.f32 %v252, %v561
        %563 = vmatmul.f32.gmra.mxu0 %v353
        %v564 = vpop.f32.mrf.mxu0
        %v565 = vadd.f32 %v257, %v564
        %566 = vmatmul.f32.gmra.mxu0 %v356
        %v567 = vpop.f32.mrf.mxu0
        %v568 = vadd.f32 %v262, %v567
        %569 = vmatmul.f32.gmra.mxu0 %v359
        %v570 = vpop.f32.mrf.mxu0
        %v571 = vadd.f32 %v267, %v570
        %572 = vmatmul.f32.gmra.mxu0 %v362
        %v573 = vpop.f32.mrf.mxu0
        %v574 = vadd.f32 %v272, %v573
        %575 = vmatmul.f32.gmra.mxu0 %v365
        %v576 = vpop.f32.mrf.mxu0
        %v577 = vadd.f32 %v277, %v576
        %578 = vmatmul.f32.gmra.mxu0 %v368
        %v579 = vpop.f32.mrf.mxu0
        %v580 = vadd.f32 %v282, %v579
        %581 = vmatmul.f32.gmra.mxu0 %v371
        %v582 = vpop.f32.mrf.mxu0
        %v583 = vadd.f32 %v287, %v582
        %584 = vmatmul.f32.gmra.mxu0 %v374
        %v585 = vpop.f32.mrf.mxu0
        %v586 = vadd.f32 %v292, %v585
        %587 = vmatmul.f32.gmra.mxu0 %v377
        %v588 = vpop.f32.mrf.mxu0
        %v589 = vadd.f32 %v297, %v588
        %590 = vmatmul.f32.gmra.mxu0 %v380
        %v591 = vpop.f32.mrf.mxu0
        %v592 = vadd.f32 %v302, %v591
        %593 = vmatmul.f32.gmra.mxu0 %v383
        %v594 = vpop.f32.mrf.mxu0
        %v595 = vadd.f32 %v307, %v594
        %596 = vmatmul.f32.gmra.mxu0 %v386
        %v597 = vpop.f32.mrf.mxu0
        %v598 = vadd.f32 %v312, %v597
        %599 = vmatmul.f32.gmra.mxu0 %v389
        %v600 = vpop.f32.mrf.mxu0
        %v601 = vadd.f32 %v317, %v600
        %602 = vmatmul.f32.gmra.mxu0 %v392
        %v603 = vpop.f32.mrf.mxu0
        %v604 = vadd.f32 %v322, %v603
        %605 = vmatmul.f32.gmra.mxu0 %v395
        %v606 = vpop.f32.mrf.mxu0
        %v607 = vadd.f32 %v327, %v606
        %608 = vdwg.mxu0
        %609 = vmatpush.msra.mxu0 0.0
        %610 = vmatpush.msra.mxu0 0.0
        %611 = vmatpush.msra.mxu0 0.0
        %612 = vmatpush.msra.mxu0 0.0
        %613 = vmatpush.msra.mxu0 0.0
        %614 = vmatpush.msra.mxu0 0.0
        %615 = vmatpush.msra.mxu0 0.0
        %616 = vmatpush.msra.mxu0 0.0
        %617 = vmatpush.msra.mxu0 0.0
        %618 = vmatpush.msra.mxu0 0.0
        %619 = vmatpush.msra.mxu0 0.0
        %620 = vmatpush.msra.mxu0 0.0
        %621 = vmatpush.msra.mxu0 0.0
        %622 = vmatpush.msra.mxu0 0.0
        %623 = vmatpush.msra.mxu0 0.0
        %624 = vmatpush.msra.mxu0 %v404
        %625 = vmatmul.f32.gmra.mxu0 %v350
        %v626 = vpop.f32.mrf.mxu0
        %v627 = vadd.f32 %v252, %v626
        %628 = vmatmul.f32.gmra.mxu0 %v353
        %v629 = vpop.f32.mrf.mxu0
        %v630 = vadd.f32 %v257, %v629
        %631 = vmatmul.f32.gmra.mxu0 %v356
        %v632 = vpop.f32.mrf.mxu0
        %v633 = vadd.f32 %v262, %v632
        %634 = vmatmul.f32.gmra.mxu0 %v359
        %v635 = vpop.f32.mrf.mxu0
        %v636 = vadd.f32 %v267, %v635
        %637 = vmatmul.f32.gmra.mxu0 %v362
        %v638 = vpop.f32.mrf.mxu0
        %v639 = vadd.f32 %v272, %v638
        %640 = vmatmul.f32.gmra.mxu0 %v365
        %v641 = vpop.f32.mrf.mxu0
        %v642 = vadd.f32 %v277, %v641
        %643 = vmatmul.f32.gmra.mxu0 %v368
        %v644 = vpop.f32.mrf.mxu0
        %v645 = vadd.f32 %v282, %v644
        %646 = vmatmul.f32.gmra.mxu0 %v371
        %v647 = vpop.f32.mrf.mxu0
        %v648 = vadd.f32 %v287, %v647
        %649 = vmatmul.f32.gmra.mxu0 %v374
        %v650 = vpop.f32.mrf.mxu0
        %v651 = vadd.f32 %v292, %v650
        %652 = vmatmul.f32.gmra.mxu0 %v377
        %v653 = vpop.f32.mrf.mxu0
        %v654 = vadd.f32 %v297, %v653
        %655 = vmatmul.f32.gmra.mxu0 %v380
        %v656 = vpop.f32.mrf.mxu0
        %v657 = vadd.f32 %v302, %v656
        %658 = vmatmul.f32.gmra.mxu0 %v383
        %v659 = vpop.f32.mrf.mxu0
        %v660 = vadd.f32 %v307, %v659
        %661 = vmatmul.f32.gmra.mxu0 %v386
        %v662 = vpop.f32.mrf.mxu0
        %v663 = vadd.f32 %v312, %v662
        %664 = vmatmul.f32.gmra.mxu0 %v389
        %v665 = vpop.f32.mrf.mxu0
        %v666 = vadd.f32 %v317, %v665
        %667 = vmatmul.f32.gmra.mxu0 %v392
        %v668 = vpop.f32.mrf.mxu0
        %v669 = vadd.f32 %v322, %v668
        %670 = vmatmul.f32.gmra.mxu0 %v395
        %v671 = vpop.f32.mrf.mxu0
        %v672 = vadd.f32 %v327, %v671
        %673 = vdwg.mxu0
        %674 = vmatpush.msra.mxu0 0.0
        %675 = vmatpush.msra.mxu0 0.0
        %676 = vmatpush.msra.mxu0 0.0
        %677 = vmatpush.msra.mxu0 0.0
        %678 = vmatpush.msra.mxu0 0.0
        %679 = vmatpush.msra.mxu0 0.0
        %680 = vmatpush.msra.mxu0 0.0
        %681 = vmatpush.msra.mxu0 0.0
        %682 = vmatpush.msra.mxu0 0.0
        %683 = vmatpush.msra.mxu0 0.0
        %684 = vmatpush.msra.mxu0 0.0
        %685 = vmatpush.msra.mxu0 0.0
        %686 = vmatpush.msra.mxu0 0.0
        %687 = vmatpush.msra.mxu0 0.0
        %688 = vmatpush.msra.mxu0 0.0
        %689 = vmatpush.msra.mxu0 %v406
        %690 = vmatmul.f32.gmra.mxu0 %v350
        %v691 = vpop.f32.mrf.mxu0
        %v692 = vadd.f32 %v252, %v691
        %693 = vmatmul.f32.gmra.mxu0 %v353
        %v694 = vpop.f32.mrf.mxu0
        %v695 = vadd.f32 %v257, %v694
        %696 = vmatmul.f32.gmra.mxu0 %v356
        %v697 = vpop.f32.mrf.mxu0
        %v698 = vadd.f32 %v262, %v697
        %699 = vmatmul.f32.gmra.mxu0 %v359
        %v700 = vpop.f32.mrf.mxu0
        %v701 = vadd.f32 %v267, %v700
        %702 = vmatmul.f32.gmra.mxu0 %v362
        %v703 = vpop.f32.mrf.mxu0
        %v704 = vadd.f32 %v272, %v703
        %705 = vmatmul.f32.gmra.mxu0 %v365
        %v706 = vpop.f32.mrf.mxu0
        %v707 = vadd.f32 %v277, %v706
        %708 = vmatmul.f32.gmra.mxu0 %v368
        %v709 = vpop.f32.mrf.mxu0
        %v710 = vadd.f32 %v282, %v709
        %711 = vmatmul.f32.gmra.mxu0 %v371
        %v712 = vpop.f32.mrf.mxu0
        %v713 = vadd.f32 %v287, %v712
        %714 = vmatmul.f32.gmra.mxu0 %v374
        %v715 = vpop.f32.mrf.mxu0
        %v716 = vadd.f32 %v292, %v715
        %717 = vmatmul.f32.gmra.mxu0 %v377
        %v718 = vpop.f32.mrf.mxu0
        %v719 = vadd.f32 %v297, %v718
        %720 = vmatmul.f32.gmra.mxu0 %v380
        %v721 = vpop.f32.mrf.mxu0
        %v722 = vadd.f32 %v302, %v721
        %723 = vmatmul.f32.gmra.mxu0 %v383
        %v724 = vpop.f32.mrf.mxu0
        %v725 = vadd.f32 %v307, %v724
        %726 = vmatmul.f32.gmra.mxu0 %v386
        %v727 = vpop.f32.mrf.mxu0
        %v728 = vadd.f32 %v312, %v727
        %729 = vmatmul.f32.gmra.mxu0 %v389
        %v730 = vpop.f32.mrf.mxu0
        %v731 = vadd.f32 %v317, %v730
        %732 = vmatmul.f32.gmra.mxu0 %v392
        %v733 = vpop.f32.mrf.mxu0
        %v734 = vadd.f32 %v322, %v733
        %735 = vmatmul.f32.gmra.mxu0 %v395
        %v736 = vpop.f32.mrf.mxu0
        %v737 = vadd.f32 %v327, %v736
        %738 = vdwg.mxu0
        %739 = vmatpush.msra.mxu0 0.0
        %740 = vmatpush.msra.mxu0 0.0
        %741 = vmatpush.msra.mxu0 0.0
        %742 = vmatpush.msra.mxu0 0.0
        %743 = vmatpush.msra.mxu0 0.0
        %744 = vmatpush.msra.mxu0 0.0
        %745 = vmatpush.msra.mxu0 0.0
        %746 = vmatpush.msra.mxu0 0.0
        %747 = vmatpush.msra.mxu0 0.0
        %748 = vmatpush.msra.mxu0 0.0
        %749 = vmatpush.msra.mxu0 0.0
        %750 = vmatpush.msra.mxu0 0.0
        %751 = vmatpush.msra.mxu0 0.0
        %752 = vmatpush.msra.mxu0 0.0
        %753 = vmatpush.msra.mxu0 0.0
        %754 = vmatpush.msra.mxu0 %v408
        %755 = vmatmul.f32.gmra.mxu0 %v350
        %v756 = vpop.f32.mrf.mxu0
        %v757 = vadd.f32 %v252, %v756
        %758 = vmatmul.f32.gmra.mxu0 %v353
        %v759 = vpop.f32.mrf.mxu0
        %v760 = vadd.f32 %v257, %v759
        %761 = vmatmul.f32.gmra.mxu0 %v356
        %v762 = vpop.f32.mrf.mxu0
        %v763 = vadd.f32 %v262, %v762
        %764 = vmatmul.f32.gmra.mxu0 %v359
        %v765 = vpop.f32.mrf.mxu0
        %v766 = vadd.f32 %v267, %v765
        %767 = vmatmul.f32.gmra.mxu0 %v362
        %v768 = vpop.f32.mrf.mxu0
        %v769 = vadd.f32 %v272, %v768
        %770 = vmatmul.f32.gmra.mxu0 %v365
        %v771 = vpop.f32.mrf.mxu0
        %v772 = vadd.f32 %v277, %v771
        %773 = vmatmul.f32.gmra.mxu0 %v368
        %v774 = vpop.f32.mrf.mxu0
        %v775 = vadd.f32 %v282, %v774
        %776 = vmatmul.f32.gmra.mxu0 %v371
        %v777 = vpop.f32.mrf.mxu0
        %v778 = vadd.f32 %v287, %v777
        %779 = vmatmul.f32.gmra.mxu0 %v374
        %v780 = vpop.f32.mrf.mxu0
        %v781 = vadd.f32 %v292, %v780
        %782 = vmatmul.f32.gmra.mxu0 %v377
        %v783 = vpop.f32.mrf.mxu0
        %v784 = vadd.f32 %v297, %v783
        %785 = vmatmul.f32.gmra.mxu0 %v380
        %v786 = vpop.f32.mrf.mxu0
        %v787 = vadd.f32 %v302, %v786
        %788 = vmatmul.f32.gmra.mxu0 %v383
        %v789 = vpop.f32.mrf.mxu0
        %v790 = vadd.f32 %v307, %v789
        %791 = vmatmul.f32.gmra.mxu0 %v386
        %v792 = vpop.f32.mrf.mxu0
        %v793 = vadd.f32 %v312, %v792
        %794 = vmatmul.f32.gmra.mxu0 %v389
        %v795 = vpop.f32.mrf.mxu0
        %v796 = vadd.f32 %v317, %v795
        %797 = vmatmul.f32.gmra.mxu0 %v392
        %v798 = vpop.f32.mrf.mxu0
        %v799 = vadd.f32 %v322, %v798
        %800 = vmatmul.f32.gmra.mxu0 %v395
        %v801 = vpop.f32.mrf.mxu0
        %v802 = vadd.f32 %v327, %v801
        %803 = vdwg.mxu0
        %804 = vmatpush.msra.mxu0 0.0
        %805 = vmatpush.msra.mxu0 0.0
        %806 = vmatpush.msra.mxu0 0.0
        %807 = vmatpush.msra.mxu0 0.0
        %808 = vmatpush.msra.mxu0 0.0
        %809 = vmatpush.msra.mxu0 0.0
        %810 = vmatpush.msra.mxu0 0.0
        %811 = vmatpush.msra.mxu0 0.0
        %812 = vmatpush.msra.mxu0 0.0
        %813 = vmatpush.msra.mxu0 0.0
        %814 = vmatpush.msra.mxu0 0.0
        %815 = vmatpush.msra.mxu0 0.0
        %816 = vmatpush.msra.mxu0 0.0
        %817 = vmatpush.msra.mxu0 0.0
        %818 = vmatpush.msra.mxu0 0.0
        %819 = vmatpush.msra.mxu0 %v410
        %820 = vmatmul.f32.gmra.mxu0 %v350
        %v821 = vpop.f32.mrf.mxu0
        %v822 = vadd.f32 %v252, %v821
        %823 = vmatmul.f32.gmra.mxu0 %v353
        %v824 = vpop.f32.mrf.mxu0
        %v825 = vadd.f32 %v257, %v824
        %826 = vmatmul.f32.gmra.mxu0 %v356
        %v827 = vpop.f32.mrf.mxu0
        %v828 = vadd.f32 %v262, %v827
        %829 = vmatmul.f32.gmra.mxu0 %v359
        %v830 = vpop.f32.mrf.mxu0
        %v831 = vadd.f32 %v267, %v830
        %832 = vmatmul.f32.gmra.mxu0 %v362
        %v833 = vpop.f32.mrf.mxu0
        %v834 = vadd.f32 %v272, %v833
        %835 = vmatmul.f32.gmra.mxu0 %v365
        %v836 = vpop.f32.mrf.mxu0
        %v837 = vadd.f32 %v277, %v836
        %838 = vmatmul.f32.gmra.mxu0 %v368
        %v839 = vpop.f32.mrf.mxu0
        %v840 = vadd.f32 %v282, %v839
        %841 = vmatmul.f32.gmra.mxu0 %v371
        %v842 = vpop.f32.mrf.mxu0
        %v843 = vadd.f32 %v287, %v842
        %844 = vmatmul.f32.gmra.mxu0 %v374
        %v845 = vpop.f32.mrf.mxu0
        %v846 = vadd.f32 %v292, %v845
        %847 = vmatmul.f32.gmra.mxu0 %v377
        %v848 = vpop.f32.mrf.mxu0
        %v849 = vadd.f32 %v297, %v848
        %850 = vmatmul.f32.gmra.mxu0 %v380
        %v851 = vpop.f32.mrf.mxu0
        %v852 = vadd.f32 %v302, %v851
        %853 = vmatmul.f32.gmra.mxu0 %v383
        %v854 = vpop.f32.mrf.mxu0
        %v855 = vadd.f32 %v307, %v854
        %856 = vmatmul.f32.gmra.mxu0 %v386
        %v857 = vpop.f32.mrf.mxu0
        %v858 = vadd.f32 %v312, %v857
        %859 = vmatmul.f32.gmra.mxu0 %v389
        %v860 = vpop.f32.mrf.mxu0
        %v861 = vadd.f32 %v317, %v860
        %862 = vmatmul.f32.gmra.mxu0 %v392
        %v863 = vpop.f32.mrf.mxu0
        %v864 = vadd.f32 %v322, %v863
        %865 = vmatmul.f32.gmra.mxu0 %v395
        %v866 = vpop.f32.mrf.mxu0
        %v867 = vadd.f32 %v327, %v866
        %868 = vdwg.mxu0
        %869 = vmatpush.msra.mxu0 0.0
        %870 = vmatpush.msra.mxu0 0.0
        %871 = vmatpush.msra.mxu0 0.0
        %872 = vmatpush.msra.mxu0 0.0
        %873 = vmatpush.msra.mxu0 0.0
        %874 = vmatpush.msra.mxu0 0.0
        %875 = vmatpush.msra.mxu0 0.0
        %876 = vmatpush.msra.mxu0 0.0
        %877 = vmatpush.msra.mxu0 0.0
        %878 = vmatpush.msra.mxu0 0.0
        %879 = vmatpush.msra.mxu0 0.0
        %880 = vmatpush.msra.mxu0 0.0
        %881 = vmatpush.msra.mxu0 0.0
        %882 = vmatpush.msra.mxu0 0.0
        %883 = vmatpush.msra.mxu0 0.0
        %884 = vmatpush.msra.mxu0 %v412
        %885 = vmatmul.f32.gmra.mxu0 %v350
        %v886 = vpop.f32.mrf.mxu0
        %v887 = vadd.f32 %v252, %v886
        %888 = vmatmul.f32.gmra.mxu0 %v353
        %v889 = vpop.f32.mrf.mxu0
        %v890 = vadd.f32 %v257, %v889
        %891 = vmatmul.f32.gmra.mxu0 %v356
        %v892 = vpop.f32.mrf.mxu0
        %v893 = vadd.f32 %v262, %v892
        %894 = vmatmul.f32.gmra.mxu0 %v359
        %v895 = vpop.f32.mrf.mxu0
        %v896 = vadd.f32 %v267, %v895
        %897 = vmatmul.f32.gmra.mxu0 %v362
        %v898 = vpop.f32.mrf.mxu0
        %v899 = vadd.f32 %v272, %v898
        %900 = vmatmul.f32.gmra.mxu0 %v365
        %v901 = vpop.f32.mrf.mxu0
        %v902 = vadd.f32 %v277, %v901
        %903 = vmatmul.f32.gmra.mxu0 %v368
        %v904 = vpop.f32.mrf.mxu0
        %v905 = vadd.f32 %v282, %v904
        %906 = vmatmul.f32.gmra.mxu0 %v371
        %v907 = vpop.f32.mrf.mxu0
        %v908 = vadd.f32 %v287, %v907
        %909 = vmatmul.f32.gmra.mxu0 %v374
        %v910 = vpop.f32.mrf.mxu0
        %v911 = vadd.f32 %v292, %v910
        %912 = vmatmul.f32.gmra.mxu0 %v377
        %v913 = vpop.f32.mrf.mxu0
        %v914 = vadd.f32 %v297, %v913
        %915 = vmatmul.f32.gmra.mxu0 %v380
        %v916 = vpop.f32.mrf.mxu0
        %v917 = vadd.f32 %v302, %v916
        %918 = vmatmul.f32.gmra.mxu0 %v383
        %v919 = vpop.f32.mrf.mxu0
        %v920 = vadd.f32 %v307, %v919
        %921 = vmatmul.f32.gmra.mxu0 %v386
        %v922 = vpop.f32.mrf.mxu0
        %v923 = vadd.f32 %v312, %v922
        %924 = vmatmul.f32.gmra.mxu0 %v389
        %v925 = vpop.f32.mrf.mxu0
        %v926 = vadd.f32 %v317, %v925
        %927 = vmatmul.f32.gmra.mxu0 %v392
        %v928 = vpop.f32.mrf.mxu0
        %v929 = vadd.f32 %v322, %v928
        %930 = vmatmul.f32.gmra.mxu0 %v395
        %v931 = vpop.f32.mrf.mxu0
        %v932 = vadd.f32 %v327, %v931
        %933 = vdwg.mxu0
        %934 = vst [vmem:[%s201] sm:$0xff] %v432
        %935 = vst [vmem:[%s201 + $0x8] sm:$0xff] %v497
        %936 = vst [vmem:[%s201 + $0x10] sm:$0xff] %v562
        %937 = vst [vmem:[%s201 + $0x18] sm:$0xff] %v627
        %938 = vst [vmem:[%s201 + $0x20] sm:$0xff] %v692
        %939 = vst [vmem:[%s201 + $0x28] sm:$0xff] %v757
        %940 = vst [vmem:[%s201 + $0x30] sm:$0xff] %v822
        %941 = vst [vmem:[%s201 + $0x38] sm:$0xff] %v887
        %942 = vst [vmem:[%s201 + $0x40] sm:$0xff] %v435
        %943 = vst [vmem:[%s201 + $0x48] sm:$0xff] %v500
        %944 = vst [vmem:[%s201 + $0x50] sm:$0xff] %v565
        %945 = vst [vmem:[%s201 + $0x58] sm:$0xff] %v630
        %946 = vst [vmem:[%s201 + $0x60] sm:$0xff] %v695
        %947 = vst [vmem:[%s201 + $0x68] sm:$0xff] %v760
        %948 = vst [vmem:[%s201 + $0x70] sm:$0xff] %v825
        %949 = vst [vmem:[%s201 + $0x78] sm:$0xff] %v890
        %950 = vst [vmem:[%s201 + $0x80] sm:$0xff] %v438
        %951 = vst [vmem:[%s201 + $0x88] sm:$0xff] %v503
        %952 = vst [vmem:[%s201 + $0x90] sm:$0xff] %v568
        %953 = vst [vmem:[%s201 + $0x98] sm:$0xff] %v633
        %954 = vst [vmem:[%s201 + $0xa0] sm:$0xff] %v698
        %955 = vst [vmem:[%s201 + $0xa8] sm:$0xff] %v763
        %956 = vst [vmem:[%s201 + $0xb0] sm:$0xff] %v828
        %957 = vst [vmem:[%s201 + $0xb8] sm:$0xff] %v893
        %958 = vst [vmem:[%s201 + $0xc0] sm:$0xff] %v441
        %959 = vst [vmem:[%s201 + $0xc8] sm:$0xff] %v506
        %960 = vst [vmem:[%s201 + $0xd0] sm:$0xff] %v571
        %961 = vst [vmem:[%s201 + $0xd8] sm:$0xff] %v636
        %962 = vst [vmem:[%s201 + $0xe0] sm:$0xff] %v701
        %963 = vst [vmem:[%s201 + $0xe8] sm:$0xff] %v766
        %964 = vst [vmem:[%s201 + $0xf0] sm:$0xff] %v831
        %965 = vst [vmem:[%s201 + $0xf8] sm:$0xff] %v896
        %966 = vst [vmem:[%s201 + $0x100] sm:$0xff] %v444
        %967 = vst [vmem:[%s201 + $0x108] sm:$0xff] %v509
        %968 = vst [vmem:[%s201 + $0x110] sm:$0xff] %v574
        %969 = vst [vmem:[%s201 + $0x118] sm:$0xff] %v639
        %970 = vst [vmem:[%s201 + $0x120] sm:$0xff] %v704
        %971 = vst [vmem:[%s201 + $0x128] sm:$0xff] %v769
        %972 = vst [vmem:[%s201 + $0x130] sm:$0xff] %v834
        %973 = vst [vmem:[%s201 + $0x138] sm:$0xff] %v899
        %974 = vst [vmem:[%s201 + $0x140] sm:$0xff] %v447
        %975 = vst [vmem:[%s201 + $0x148] sm:$0xff] %v512
        %976 = vst [vmem:[%s201 + $0x150] sm:$0xff] %v577
        %977 = vst [vmem:[%s201 + $0x158] sm:$0xff] %v642
        %978 = vst [vmem:[%s201 + $0x160] sm:$0xff] %v707
        %979 = vst [vmem:[%s201 + $0x168] sm:$0xff] %v772
        %980 = vst [vmem:[%s201 + $0x170] sm:$0xff] %v837
        %981 = vst [vmem:[%s201 + $0x178] sm:$0xff] %v902
        %982 = vst [vmem:[%s201 + $0x180] sm:$0xff] %v450
        %983 = vst [vmem:[%s201 + $0x188] sm:$0xff] %v515
        %984 = vst [vmem:[%s201 + $0x190] sm:$0xff] %v580
        %985 = vst [vmem:[%s201 + $0x198] sm:$0xff] %v645
        %986 = vst [vmem:[%s201 + $0x1a0] sm:$0xff] %v710
        %987 = vst [vmem:[%s201 + $0x1a8] sm:$0xff] %v775
        %988 = vst [vmem:[%s201 + $0x1b0] sm:$0xff] %v840
        %989 = vst [vmem:[%s201 + $0x1b8] sm:$0xff] %v905
        %990 = vst [vmem:[%s201 + $0x1c0] sm:$0xff] %v453
        %991 = vst [vmem:[%s201 + $0x1c8] sm:$0xff] %v518
        %992 = vst [vmem:[%s201 + $0x1d0] sm:$0xff] %v583
        %993 = vst [vmem:[%s201 + $0x1d8] sm:$0xff] %v648
        %994 = vst [vmem:[%s201 + $0x1e0] sm:$0xff] %v713
        %995 = vst [vmem:[%s201 + $0x1e8] sm:$0xff] %v778
        %996 = vst [vmem:[%s201 + $0x1f0] sm:$0xff] %v843
        %997 = vst [vmem:[%s201 + $0x1f8] sm:$0xff] %v908
        %998 = vst [vmem:[%s201 + $0x200] sm:$0xff] %v456
        %999 = vst [vmem:[%s201 + $0x208] sm:$0xff] %v521
        %1000 = vst [vmem:[%s201 + $0x210] sm:$0xff] %v586
        %1001 = vst [vmem:[%s201 + $0x218] sm:$0xff] %v651
        %1002 = vst [vmem:[%s201 + $0x220] sm:$0xff] %v716
        %1003 = vst [vmem:[%s201 + $0x228] sm:$0xff] %v781
        %1004 = vst [vmem:[%s201 + $0x230] sm:$0xff] %v846
        %1005 = vst [vmem:[%s201 + $0x238] sm:$0xff] %v911
        %1006 = vst [vmem:[%s201 + $0x240] sm:$0xff] %v459
        %1007 = vst [vmem:[%s201 + $0x248] sm:$0xff] %v524
        %1008 = vst [vmem:[%s201 + $0x250] sm:$0xff] %v589
        %1009 = vst [vmem:[%s201 + $0x258] sm:$0xff] %v654
        %1010 = vst [vmem:[%s201 + $0x260] sm:$0xff] %v719
        %1011 = vst [vmem:[%s201 + $0x268] sm:$0xff] %v784
        %1012 = vst [vmem:[%s201 + $0x270] sm:$0xff] %v849
        %1013 = vst [vmem:[%s201 + $0x278] sm:$0xff] %v914
        %1014 = vst [vmem:[%s201 + $0x280] sm:$0xff] %v462
        %1015 = vst [vmem:[%s201 + $0x288] sm:$0xff] %v527
        %1016 = vst [vmem:[%s201 + $0x290] sm:$0xff] %v592
        %1017 = vst [vmem:[%s201 + $0x298] sm:$0xff] %v657
        %1018 = vst [vmem:[%s201 + $0x2a0] sm:$0xff] %v722
        %1019 = vst [vmem:[%s201 + $0x2a8] sm:$0xff] %v787
        %1020 = vst [vmem:[%s201 + $0x2b0] sm:$0xff] %v852
        %1021 = vst [vmem:[%s201 + $0x2b8] sm:$0xff] %v917
        %1022 = vst [vmem:[%s201 + $0x2c0] sm:$0xff] %v465
        %1023 = vst [vmem:[%s201 + $0x2c8] sm:$0xff] %v530
        %1024 = vst [vmem:[%s201 + $0x2d0] sm:$0xff] %v595
        %1025 = vst [vmem:[%s201 + $0x2d8] sm:$0xff] %v660
        %1026 = vst [vmem:[%s201 + $0x2e0] sm:$0xff] %v725
        %1027 = vst [vmem:[%s201 + $0x2e8] sm:$0xff] %v790
        %1028 = vst [vmem:[%s201 + $0x2f0] sm:$0xff] %v855
        %1029 = vst [vmem:[%s201 + $0x2f8] sm:$0xff] %v920
        %1030 = vst [vmem:[%s201 + $0x300] sm:$0xff] %v468
        %1031 = vst [vmem:[%s201 + $0x308] sm:$0xff] %v533
        %1032 = vst [vmem:[%s201 + $0x310] sm:$0xff] %v598
        %1033 = vst [vmem:[%s201 + $0x318] sm:$0xff] %v663
        %1034 = vst [vmem:[%s201 + $0x320] sm:$0xff] %v728
        %1035 = vst [vmem:[%s201 + $0x328] sm:$0xff] %v793
        %1036 = vst [vmem:[%s201 + $0x330] sm:$0xff] %v858
        %1037 = vst [vmem:[%s201 + $0x338] sm:$0xff] %v923
        %1038 = vst [vmem:[%s201 + $0x340] sm:$0xff] %v471
        %1039 = vst [vmem:[%s201 + $0x348] sm:$0xff] %v536
        %1040 = vst [vmem:[%s201 + $0x350] sm:$0xff] %v601
        %1041 = vst [vmem:[%s201 + $0x358] sm:$0xff] %v666
        %1042 = vst [vmem:[%s201 + $0x360] sm:$0xff] %v731
        %1043 = vst [vmem:[%s201 + $0x368] sm:$0xff] %v796
        %1044 = vst [vmem:[%s201 + $0x370] sm:$0xff] %v861
        %1045 = vst [vmem:[%s201 + $0x378] sm:$0xff] %v926
        %1046 = vst [vmem:[%s201 + $0x380] sm:$0xff] %v474
        %1047 = vst [vmem:[%s201 + $0x388] sm:$0xff] %v539
        %1048 = vst [vmem:[%s201 + $0x390] sm:$0xff] %v604
        %1049 = vst [vmem:[%s201 + $0x398] sm:$0xff] %v669
        %1050 = vst [vmem:[%s201 + $0x3a0] sm:$0xff] %v734
        %1051 = vst [vmem:[%s201 + $0x3a8] sm:$0xff] %v799
        %1052 = vst [vmem:[%s201 + $0x3b0] sm:$0xff] %v864
        %1053 = vst [vmem:[%s201 + $0x3b8] sm:$0xff] %v929
        %1054 = vst [vmem:[%s201 + $0x3c0] sm:$0xff] %v477
        %1055 = vst [vmem:[%s201 + $0x3c8] sm:$0xff] %v542
        %1056 = vst [vmem:[%s201 + $0x3d0] sm:$0xff] %v607
        %1057 = vst [vmem:[%s201 + $0x3d8] sm:$0xff] %v672
        %1058 = vst [vmem:[%s201 + $0x3e0] sm:$0xff] %v737
        %1059 = vst [vmem:[%s201 + $0x3e8] sm:$0xff] %v802
        %1060 = vst [vmem:[%s201 + $0x3f0] sm:$0xff] %v867
        %1061 = vst [vmem:[%s201 + $0x3f8] sm:$0xff] %v932
        %s1062 = sand.u32 %s107, 1
        %s1063 = sand.u32 %s107, 1
        %s1064 = smul.addr %s1063, 1024
        %s1065 = scalar_lea.vmem [#allocation4], %s1064
        // Predicated region
        $region37: #{conv_transpose3d_2x2.1} parent=31 // pred_check
          %p1066 = pneg %p117
        $region38: #{conv_transpose3d_2x2.1} parent=31 // pred_check_branch
          %1068 = sbr.rel (%p1066) target = $region40
        $region39: #{conv_transpose3d_2x2.1} parent=31 // pred_region
          %s1069 = smul.u32 8, %s20
          %s1070 = smul.addr %s19, 512
          %s1071 = sadd.s32 %s1069, %s1070
          %s1072 = smul.addr %s1071, 8
          %s1073 = scalar_lea.vmem %s3, %s1072
          // Predicated region
          $region41: #{conv_transpose3d_2x2.1} parent=39 // pred_check
            _
          $region42: #{conv_transpose3d_2x2.1} parent=39 // pred_check_branch
            %1075 = sbr.rel (0) target = $region44
          $region43: #{conv_transpose3d_2x2.1} parent=39 // pred_region
            // Predicated region
            $region45: #{conv_transpose3d_2x2.1} parent=43 // pred_check
              _
            $region46: #{conv_transpose3d_2x2.1} parent=43 // pred_check_branch
              %1077 = sbr.rel (0) target = $region48
            $region47: #{conv_transpose3d_2x2.1} parent=43 // pred_region
              loop: start=0, step=1, limit=1
              $region49: #{conv_transpose3d_2x2.1} parent=47 // loop_pre_header
                _
              $region50: #{conv_transpose3d_2x2.1} parent=47 // loop_header
                %s1079 = sphi 0, %s1083
                %p1080 = scmp.ge.s32.totalorder %s1079, 1
                %s1084 = sphi %s1065, %s1065
                %s1085 = sphi %s1073, %s1073
              $region51: #{conv_transpose3d_2x2.1} parent=47 // loop_header_branch
                %1082 = sbr.rel (%p1080) target = $region55
              $region52: #{conv_transpose3d_2x2.1} parent=47 // loop_body
                %v1086 = vld [vmem:[%s1084] sm:$0xff]
                %1087 = vst [vmem:[%s1085] sm:$0xff] %v1086
                %v1088 = vld [vmem:[%s1084 + $0x8] sm:$0xff]
                %1089 = vst [vmem:[%s1085 + $0x8] sm:$0xff] %v1088
                %v1090 = vld [vmem:[%s1084 + $0x10] sm:$0xff]
                %1091 = vst [vmem:[%s1085 + $0x10] sm:$0xff] %v1090
                %v1092 = vld [vmem:[%s1084 + $0x18] sm:$0xff]
                %1093 = vst [vmem:[%s1085 + $0x18] sm:$0xff] %v1092
                %v1094 = vld [vmem:[%s1084 + $0x20] sm:$0xff]
                %1095 = vst [vmem:[%s1085 + $0x20] sm:$0xff] %v1094
                %v1096 = vld [vmem:[%s1084 + $0x28] sm:$0xff]
                %1097 = vst [vmem:[%s1085 + $0x28] sm:$0xff] %v1096
                %v1098 = vld [vmem:[%s1084 + $0x30] sm:$0xff]
                %1099 = vst [vmem:[%s1085 + $0x30] sm:$0xff] %v1098
                %v1100 = vld [vmem:[%s1084 + $0x38] sm:$0xff]
                %1101 = vst [vmem:[%s1085 + $0x38] sm:$0xff] %v1100
                %v1102 = vld [vmem:[%s1084 + $0x40] sm:$0xff]
                %1103 = vst [vmem:[%s1085 + $0x100] sm:$0xff] %v1102
                %v1104 = vld [vmem:[%s1084 + $0x48] sm:$0xff]
                %1105 = vst [vmem:[%s1085 + $0x108] sm:$0xff] %v1104
                %v1106 = vld [vmem:[%s1084 + $0x50] sm:$0xff]
                %1107 = vst [vmem:[%s1085 + $0x110] sm:$0xff] %v1106
                %v1108 = vld [vmem:[%s1084 + $0x58] sm:$0xff]
                %1109 = vst [vmem:[%s1085 + $0x118] sm:$0xff] %v1108
                %v1110 = vld [vmem:[%s1084 + $0x60] sm:$0xff]
                %1111 = vst [vmem:[%s1085 + $0x120] sm:$0xff] %v1110
                %v1112 = vld [vmem:[%s1084 + $0x68] sm:$0xff]
                %1113 = vst [vmem:[%s1085 + $0x128] sm:$0xff] %v1112
                %v1114 = vld [vmem:[%s1084 + $0x70] sm:$0xff]
                %1115 = vst [vmem:[%s1085 + $0x130] sm:$0xff] %v1114
                %v1116 = vld [vmem:[%s1084 + $0x78] sm:$0xff]
                %1117 = vst [vmem:[%s1085 + $0x138] sm:$0xff] %v1116
                %v1118 = vld [vmem:[%s1084 + $0x80] sm:$0xff]
                %1119 = vst [vmem:[%s1085 + $0x200] sm:$0xff] %v1118
                %v1120 = vld [vmem:[%s1084 + $0x88] sm:$0xff]
                %1121 = vst [vmem:[%s1085 + $0x208] sm:$0xff] %v1120
                %v1122 = vld [vmem:[%s1084 + $0x90] sm:$0xff]
                %1123 = vst [vmem:[%s1085 + $0x210] sm:$0xff] %v1122
                %v1124 = vld [vmem:[%s1084 + $0x98] sm:$0xff]
                %1125 = vst [vmem:[%s1085 + $0x218] sm:$0xff] %v1124
                %v1126 = vld [vmem:[%s1084 + $0xa0] sm:$0xff]
                %1127 = vst [vmem:[%s1085 + $0x220] sm:$0xff] %v1126
                %v1128 = vld [vmem:[%s1084 + $0xa8] sm:$0xff]
                %1129 = vst [vmem:[%s1085 + $0x228] sm:$0xff] %v1128
                %v1130 = vld [vmem:[%s1084 + $0xb0] sm:$0xff]
                %1131 = vst [vmem:[%s1085 + $0x230] sm:$0xff] %v1130
                %v1132 = vld [vmem:[%s1084 + $0xb8] sm:$0xff]
                %1133 = vst [vmem:[%s1085 + $0x238] sm:$0xff] %v1132
                %v1134 = vld [vmem:[%s1084 + $0xc0] sm:$0xff]
                %1135 = vst [vmem:[%s1085 + $0x300] sm:$0xff] %v1134
                %v1136 = vld [vmem:[%s1084 + $0xc8] sm:$0xff]
                %1137 = vst [vmem:[%s1085 + $0x308] sm:$0xff] %v1136
                %v1138 = vld [vmem:[%s1084 + $0xd0] sm:$0xff]
                %1139 = vst [vmem:[%s1085 + $0x310] sm:$0xff] %v1138
                %v1140 = vld [vmem:[%s1084 + $0xd8] sm:$0xff]
                %1141 = vst [vmem:[%s1085 + $0x318] sm:$0xff] %v1140
                %v1142 = vld [vmem:[%s1084 + $0xe0] sm:$0xff]
                %1143 = vst [vmem:[%s1085 + $0x320] sm:$0xff] %v1142
                %v1144 = vld [vmem:[%s1084 + $0xe8] sm:$0xff]
                %1145 = vst [vmem:[%s1085 + $0x328] sm:$0xff] %v1144
                %v1146 = vld [vmem:[%s1084 + $0xf0] sm:$0xff]
                %1147 = vst [vmem:[%s1085 + $0x330] sm:$0xff] %v1146
                %v1148 = vld [vmem:[%s1084 + $0xf8] sm:$0xff]
                %1149 = vst [vmem:[%s1085 + $0x338] sm:$0xff] %v1148
                %v1150 = vld [vmem:[%s1084 + $0x100] sm:$0xff]
                %1151 = vst [vmem:[%s1085 + $0x400] sm:$0xff] %v1150
                %v1152 = vld [vmem:[%s1084 + $0x108] sm:$0xff]
                %1153 = vst [vmem:[%s1085 + $0x408] sm:$0xff] %v1152
                %v1154 = vld [vmem:[%s1084 + $0x110] sm:$0xff]
                %1155 = vst [vmem:[%s1085 + $0x410] sm:$0xff] %v1154
                %v1156 = vld [vmem:[%s1084 + $0x118] sm:$0xff]
                %1157 = vst [vmem:[%s1085 + $0x418] sm:$0xff] %v1156
                %v1158 = vld [vmem:[%s1084 + $0x120] sm:$0xff]
                %1159 = vst [vmem:[%s1085 + $0x420] sm:$0xff] %v1158
                %v1160 = vld [vmem:[%s1084 + $0x128] sm:$0xff]
                %1161 = vst [vmem:[%s1085 + $0x428] sm:$0xff] %v1160
                %v1162 = vld [vmem:[%s1084 + $0x130] sm:$0xff]
                %1163 = vst [vmem:[%s1085 + $0x430] sm:$0xff] %v1162
                %v1164 = vld [vmem:[%s1084 + $0x138] sm:$0xff]
                %1165 = vst [vmem:[%s1085 + $0x438] sm:$0xff] %v1164
                %v1166 = vld [vmem:[%s1084 + $0x140] sm:$0xff]
                %1167 = vst [vmem:[%s1085 + $0x500] sm:$0xff] %v1166
                %v1168 = vld [vmem:[%s1084 + $0x148] sm:$0xff]
                %1169 = vst [vmem:[%s1085 + $0x508] sm:$0xff] %v1168
                %v1170 = vld [vmem:[%s1084 + $0x150] sm:$0xff]
                %1171 = vst [vmem:[%s1085 + $0x510] sm:$0xff] %v1170
                %v1172 = vld [vmem:[%s1084 + $0x158] sm:$0xff]
                %1173 = vst [vmem:[%s1085 + $0x518] sm:$0xff] %v1172
                %v1174 = vld [vmem:[%s1084 + $0x160] sm:$0xff]
                %1175 = vst [vmem:[%s1085 + $0x520] sm:$0xff] %v1174
                %v1176 = vld [vmem:[%s1084 + $0x168] sm:$0xff]
                %1177 = vst [vmem:[%s1085 + $0x528] sm:$0xff] %v1176
                %v1178 = vld [vmem:[%s1084 + $0x170] sm:$0xff]
                %1179 = vst [vmem:[%s1085 + $0x530] sm:$0xff] %v1178
                %v1180 = vld [vmem:[%s1084 + $0x178] sm:$0xff]
                %1181 = vst [vmem:[%s1085 + $0x538] sm:$0xff] %v1180
                %v1182 = vld [vmem:[%s1084 + $0x180] sm:$0xff]
                %1183 = vst [vmem:[%s1085 + $0x600] sm:$0xff] %v1182
                %v1184 = vld [vmem:[%s1084 + $0x188] sm:$0xff]
                %1185 = vst [vmem:[%s1085 + $0x608] sm:$0xff] %v1184
                %v1186 = vld [vmem:[%s1084 + $0x190] sm:$0xff]
                %1187 = vst [vmem:[%s1085 + $0x610] sm:$0xff] %v1186
                %v1188 = vld [vmem:[%s1084 + $0x198] sm:$0xff]
                %1189 = vst [vmem:[%s1085 + $0x618] sm:$0xff] %v1188
                %v1190 = vld [vmem:[%s1084 + $0x1a0] sm:$0xff]
                %1191 = vst [vmem:[%s1085 + $0x620] sm:$0xff] %v1190
                %v1192 = vld [vmem:[%s1084 + $0x1a8] sm:$0xff]
                %1193 = vst [vmem:[%s1085 + $0x628] sm:$0xff] %v1192
                %v1194 = vld [vmem:[%s1084 + $0x1b0] sm:$0xff]
                %1195 = vst [vmem:[%s1085 + $0x630] sm:$0xff] %v1194
                %v1196 = vld [vmem:[%s1084 + $0x1b8] sm:$0xff]
                %1197 = vst [vmem:[%s1085 + $0x638] sm:$0xff] %v1196
                %v1198 = vld [vmem:[%s1084 + $0x1c0] sm:$0xff]
                %1199 = vst [vmem:[%s1085 + $0x700] sm:$0xff] %v1198
                %v1200 = vld [vmem:[%s1084 + $0x1c8] sm:$0xff]
                %1201 = vst [vmem:[%s1085 + $0x708] sm:$0xff] %v1200
                %v1202 = vld [vmem:[%s1084 + $0x1d0] sm:$0xff]
                %1203 = vst [vmem:[%s1085 + $0x710] sm:$0xff] %v1202
                %v1204 = vld [vmem:[%s1084 + $0x1d8] sm:$0xff]
                %1205 = vst [vmem:[%s1085 + $0x718] sm:$0xff] %v1204
                %v1206 = vld [vmem:[%s1084 + $0x1e0] sm:$0xff]
                %1207 = vst [vmem:[%s1085 + $0x720] sm:$0xff] %v1206
                %v1208 = vld [vmem:[%s1084 + $0x1e8] sm:$0xff]
                %1209 = vst [vmem:[%s1085 + $0x728] sm:$0xff] %v1208
                %v1210 = vld [vmem:[%s1084 + $0x1f0] sm:$0xff]
                %1211 = vst [vmem:[%s1085 + $0x730] sm:$0xff] %v1210
                %v1212 = vld [vmem:[%s1084 + $0x1f8] sm:$0xff]
                %1213 = vst [vmem:[%s1085 + $0x738] sm:$0xff] %v1212
                %v1214 = vld [vmem:[%s1084 + $0x200] sm:$0xff]
                %1215 = vst [vmem:[%s1085 + $0x800] sm:$0xff] %v1214
                %v1216 = vld [vmem:[%s1084 + $0x208] sm:$0xff]
                %1217 = vst [vmem:[%s1085 + $0x808] sm:$0xff] %v1216
                %v1218 = vld [vmem:[%s1084 + $0x210] sm:$0xff]
                %1219 = vst [vmem:[%s1085 + $0x810] sm:$0xff] %v1218
                %v1220 = vld [vmem:[%s1084 + $0x218] sm:$0xff]
                %1221 = vst [vmem:[%s1085 + $0x818] sm:$0xff] %v1220
                %v1222 = vld [vmem:[%s1084 + $0x220] sm:$0xff]
                %1223 = vst [vmem:[%s1085 + $0x820] sm:$0xff] %v1222
                %v1224 = vld [vmem:[%s1084 + $0x228] sm:$0xff]
                %1225 = vst [vmem:[%s1085 + $0x828] sm:$0xff] %v1224
                %v1226 = vld [vmem:[%s1084 + $0x230] sm:$0xff]
                %1227 = vst [vmem:[%s1085 + $0x830] sm:$0xff] %v1226
                %v1228 = vld [vmem:[%s1084 + $0x238] sm:$0xff]
                %1229 = vst [vmem:[%s1085 + $0x838] sm:$0xff] %v1228
                %v1230 = vld [vmem:[%s1084 + $0x240] sm:$0xff]
                %1231 = vst [vmem:[%s1085 + $0x900] sm:$0xff] %v1230
                %v1232 = vld [vmem:[%s1084 + $0x248] sm:$0xff]
                %1233 = vst [vmem:[%s1085 + $0x908] sm:$0xff] %v1232
                %v1234 = vld [vmem:[%s1084 + $0x250] sm:$0xff]
                %1235 = vst [vmem:[%s1085 + $0x910] sm:$0xff] %v1234
                %v1236 = vld [vmem:[%s1084 + $0x258] sm:$0xff]
                %1237 = vst [vmem:[%s1085 + $0x918] sm:$0xff] %v1236
                %v1238 = vld [vmem:[%s1084 + $0x260] sm:$0xff]
                %1239 = vst [vmem:[%s1085 + $0x920] sm:$0xff] %v1238
                %v1240 = vld [vmem:[%s1084 + $0x268] sm:$0xff]
                %1241 = vst [vmem:[%s1085 + $0x928] sm:$0xff] %v1240
                %v1242 = vld [vmem:[%s1084 + $0x270] sm:$0xff]
                %1243 = vst [vmem:[%s1085 + $0x930] sm:$0xff] %v1242
                %v1244 = vld [vmem:[%s1084 + $0x278] sm:$0xff]
                %1245 = vst [vmem:[%s1085 + $0x938] sm:$0xff] %v1244
                %v1246 = vld [vmem:[%s1084 + $0x280] sm:$0xff]
                %1247 = vst [vmem:[%s1085 + $0xa00] sm:$0xff] %v1246
                %v1248 = vld [vmem:[%s1084 + $0x288] sm:$0xff]
                %1249 = vst [vmem:[%s1085 + $0xa08] sm:$0xff] %v1248
                %v1250 = vld [vmem:[%s1084 + $0x290] sm:$0xff]
                %1251 = vst [vmem:[%s1085 + $0xa10] sm:$0xff] %v1250
                %v1252 = vld [vmem:[%s1084 + $0x298] sm:$0xff]
                %1253 = vst [vmem:[%s1085 + $0xa18] sm:$0xff] %v1252
                %v1254 = vld [vmem:[%s1084 + $0x2a0] sm:$0xff]
                %1255 = vst [vmem:[%s1085 + $0xa20] sm:$0xff] %v1254
                %v1256 = vld [vmem:[%s1084 + $0x2a8] sm:$0xff]
                %1257 = vst [vmem:[%s1085 + $0xa28] sm:$0xff] %v1256
                %v1258 = vld [vmem:[%s1084 + $0x2b0] sm:$0xff]
                %1259 = vst [vmem:[%s1085 + $0xa30] sm:$0xff] %v1258
                %v1260 = vld [vmem:[%s1084 + $0x2b8] sm:$0xff]
                %1261 = vst [vmem:[%s1085 + $0xa38] sm:$0xff] %v1260
                %v1262 = vld [vmem:[%s1084 + $0x2c0] sm:$0xff]
                %1263 = vst [vmem:[%s1085 + $0xb00] sm:$0xff] %v1262
                %v1264 = vld [vmem:[%s1084 + $0x2c8] sm:$0xff]
                %1265 = vst [vmem:[%s1085 + $0xb08] sm:$0xff] %v1264
                %v1266 = vld [vmem:[%s1084 + $0x2d0] sm:$0xff]
                %1267 = vst [vmem:[%s1085 + $0xb10] sm:$0xff] %v1266
                %v1268 = vld [vmem:[%s1084 + $0x2d8] sm:$0xff]
                %1269 = vst [vmem:[%s1085 + $0xb18] sm:$0xff] %v1268
                %v1270 = vld [vmem:[%s1084 + $0x2e0] sm:$0xff]
                %1271 = vst [vmem:[%s1085 + $0xb20] sm:$0xff] %v1270
                %v1272 = vld [vmem:[%s1084 + $0x2e8] sm:$0xff]
                %1273 = vst [vmem:[%s1085 + $0xb28] sm:$0xff] %v1272
                %v1274 = vld [vmem:[%s1084 + $0x2f0] sm:$0xff]
                %1275 = vst [vmem:[%s1085 + $0xb30] sm:$0xff] %v1274
                %v1276 = vld [vmem:[%s1084 + $0x2f8] sm:$0xff]
                %1277 = vst [vmem:[%s1085 + $0xb38] sm:$0xff] %v1276
                %v1278 = vld [vmem:[%s1084 + $0x300] sm:$0xff]
                %1279 = vst [vmem:[%s1085 + $0xc00] sm:$0xff] %v1278
                %v1280 = vld [vmem:[%s1084 + $0x308] sm:$0xff]
                %1281 = vst [vmem:[%s1085 + $0xc08] sm:$0xff] %v1280
                %v1282 = vld [vmem:[%s1084 + $0x310] sm:$0xff]
                %1283 = vst [vmem:[%s1085 + $0xc10] sm:$0xff] %v1282
                %v1284 = vld [vmem:[%s1084 + $0x318] sm:$0xff]
                %1285 = vst [vmem:[%s1085 + $0xc18] sm:$0xff] %v1284
                %v1286 = vld [vmem:[%s1084 + $0x320] sm:$0xff]
                %1287 = vst [vmem:[%s1085 + $0xc20] sm:$0xff] %v1286
                %v1288 = vld [vmem:[%s1084 + $0x328] sm:$0xff]
                %1289 = vst [vmem:[%s1085 + $0xc28] sm:$0xff] %v1288
                %v1290 = vld [vmem:[%s1084 + $0x330] sm:$0xff]
                %1291 = vst [vmem:[%s1085 + $0xc30] sm:$0xff] %v1290
                %v1292 = vld [vmem:[%s1084 + $0x338] sm:$0xff]
                %1293 = vst [vmem:[%s1085 + $0xc38] sm:$0xff] %v1292
                %v1294 = vld [vmem:[%s1084 + $0x340] sm:$0xff]
                %1295 = vst [vmem:[%s1085 + $0xd00] sm:$0xff] %v1294
                %v1296 = vld [vmem:[%s1084 + $0x348] sm:$0xff]
                %1297 = vst [vmem:[%s1085 + $0xd08] sm:$0xff] %v1296
                %v1298 = vld [vmem:[%s1084 + $0x350] sm:$0xff]
                %1299 = vst [vmem:[%s1085 + $0xd10] sm:$0xff] %v1298
                %v1300 = vld [vmem:[%s1084 + $0x358] sm:$0xff]
                %1301 = vst [vmem:[%s1085 + $0xd18] sm:$0xff] %v1300
                %v1302 = vld [vmem:[%s1084 + $0x360] sm:$0xff]
                %1303 = vst [vmem:[%s1085 + $0xd20] sm:$0xff] %v1302
                %v1304 = vld [vmem:[%s1084 + $0x368] sm:$0xff]
                %1305 = vst [vmem:[%s1085 + $0xd28] sm:$0xff] %v1304
                %v1306 = vld [vmem:[%s1084 + $0x370] sm:$0xff]
                %1307 = vst [vmem:[%s1085 + $0xd30] sm:$0xff] %v1306
                %v1308 = vld [vmem:[%s1084 + $0x378] sm:$0xff]
                %1309 = vst [vmem:[%s1085 + $0xd38] sm:$0xff] %v1308
                %v1310 = vld [vmem:[%s1084 + $0x380] sm:$0xff]
                %1311 = vst [vmem:[%s1085 + $0xe00] sm:$0xff] %v1310
                %v1312 = vld [vmem:[%s1084 + $0x388] sm:$0xff]
                %1313 = vst [vmem:[%s1085 + $0xe08] sm:$0xff] %v1312
                %v1314 = vld [vmem:[%s1084 + $0x390] sm:$0xff]
                %1315 = vst [vmem:[%s1085 + $0xe10] sm:$0xff] %v1314
                %v1316 = vld [vmem:[%s1084 + $0x398] sm:$0xff]
                %1317 = vst [vmem:[%s1085 + $0xe18] sm:$0xff] %v1316
                %v1318 = vld [vmem:[%s1084 + $0x3a0] sm:$0xff]
                %1319 = vst [vmem:[%s1085 + $0xe20] sm:$0xff] %v1318
                %v1320 = vld [vmem:[%s1084 + $0x3a8] sm:$0xff]
                %1321 = vst [vmem:[%s1085 + $0xe28] sm:$0xff] %v1320
                %v1322 = vld [vmem:[%s1084 + $0x3b0] sm:$0xff]
                %1323 = vst [vmem:[%s1085 + $0xe30] sm:$0xff] %v1322
                %v1324 = vld [vmem:[%s1084 + $0x3b8] sm:$0xff]
                %1325 = vst [vmem:[%s1085 + $0xe38] sm:$0xff] %v1324
                %v1326 = vld [vmem:[%s1084 + $0x3c0] sm:$0xff]
                %1327 = vst [vmem:[%s1085 + $0xf00] sm:$0xff] %v1326
                %v1328 = vld [vmem:[%s1084 + $0x3c8] sm:$0xff]
                %1329 = vst [vmem:[%s1085 + $0xf08] sm:$0xff] %v1328
                %v1330 = vld [vmem:[%s1084 + $0x3d0] sm:$0xff]
                %1331 = vst [vmem:[%s1085 + $0xf10] sm:$0xff] %v1330
                %v1332 = vld [vmem:[%s1084 + $0x3d8] sm:$0xff]
                %1333 = vst [vmem:[%s1085 + $0xf18] sm:$0xff] %v1332
                %v1334 = vld [vmem:[%s1084 + $0x3e0] sm:$0xff]
                %1335 = vst [vmem:[%s1085 + $0xf20] sm:$0xff] %v1334
                %v1336 = vld [vmem:[%s1084 + $0x3e8] sm:$0xff]
                %1337 = vst [vmem:[%s1085 + $0xf28] sm:$0xff] %v1336
                %v1338 = vld [vmem:[%s1084 + $0x3f0] sm:$0xff]
                %1339 = vst [vmem:[%s1085 + $0xf30] sm:$0xff] %v1338
                %v1340 = vld [vmem:[%s1084 + $0x3f8] sm:$0xff]
                %1341 = vst [vmem:[%s1085 + $0xf38] sm:$0xff] %v1340
              $region53: #{conv_transpose3d_2x2.1} parent=47 // loop_footer
                %s1083 = sadd.s32 1, %s1079
              $region54: #{conv_transpose3d_2x2.1} parent=47 // loop_footer_branch
                %1078 = sbr.rel target = $region50
              $region55: #{conv_transpose3d_2x2.1} parent=47 // loop_exit
                _
            $region48: #{conv_transpose3d_2x2.1} parent=43 // pred_fallthru
              _
            // Predicated region
            $region56: #{conv_transpose3d_2x2.1} parent=43 // pred_check
              _
            $region57: #{conv_transpose3d_2x2.1} parent=43 // pred_check_branch
              %1343 = sbr.rel target = $region59
            $region58: #{conv_transpose3d_2x2.1} parent=43 // pred_region
              _
            $region59: #{conv_transpose3d_2x2.1} parent=43 // pred_fallthru
              _
          $region44: #{conv_transpose3d_2x2.1} parent=39 // pred_fallthru
            _
          %1344 = vnop
        $region40: #{conv_transpose3d_2x2.1} parent=31 // pred_fallthru
          _
      $region32: #{conv_transpose3d_2x2.1} parent=5 // pred_fallthru
        _
      %p1345 = scmp.le.s32.totalorder 2, %s10
      // Predicated region
      $region60: #{conv_transpose3d_2x2.1} parent=5 // pred_check
        %p1346 = pneg %p1345
      $region61: #{conv_transpose3d_2x2.1} parent=5 // pred_check_branch
        %1348 = sbr.rel (%p1346) target = $region63
      $region62: #{conv_transpose3d_2x2.1} parent=5 // pred_region
        %s1349 = ssub.s32 %s10, 2
        // Predicated region
        $region64: #{conv_transpose3d_2x2.1} parent=62 // pred_check
          %p1350 = pneg %p123
        $region65: #{conv_transpose3d_2x2.1} parent=62 // pred_check_branch
          %1352 = sbr.rel (%p1350) target = $region67
        $region66: #{conv_transpose3d_2x2.1} parent=62 // pred_region
          %s1353 = sand.u32 %s108, 1
          %s1354 = sand.u32 %s108, 1
          %s1355 = smul.addr %s1354, 1024
          %s1356 = scalar_lea.vmem [#allocation4], %s1355
        $region67: #{conv_transpose3d_2x2.1} parent=62 // pred_fallthru
          _
      $region63: #{conv_transpose3d_2x2.1} parent=5 // pred_fallthru
        _
    $region6: #{conv_transpose3d_2x2.1} parent=1 // loop_footer
      %s14 = sadd.s32 1, %s10
    $region7: #{conv_transpose3d_2x2.1} parent=1 // loop_footer_branch
      %9 = sbr.rel target = $region3
    $region8: #{conv_transpose3d_2x2.1} parent=1 // loop_exit
      _
    %1357 = vsyncpa [#allocation3], 1
    %s1358 = scalar_lea.sflag [#allocation3], 1
    %1359 = vsyncpa %s1358, 1

</llo_original>
